<compile_context>
chip_gen: v7x
topology: tpu7x:2x2x1
jax: 0.10.0
libtpu: 0.0.40
codegen_flags: <defaults>
</compile_context>

<pallas_src>
import functools
import numpy as np
import jax
import jax.numpy as jnp
from jax.experimental import pallas as pl
from jax.experimental.pallas import tpu as pltpu

SLAB = 128  # lane-dense slab width for all packed inputs/outputs


def _round_up(x, m):
    return ((x + m - 1) // m) * m


# ----------------------------------------------------------------------------
# Kernel 1: fused point-feature projection + ReLU + scatter_mean pooling
# (tiled over N, reduction into a resident [M_pad, 128] superpoint slab)
# ----------------------------------------------------------------------------
def pool_kernel(ids_ref, x_ref, w_ref, out_ref, *, c_relu):
    """x_ref   : [TILE_N, IN+4]  per-point [feats | coords | 1] (zero-padded rows)
       ids_ref : [1, TILE_N]     int32 superpoint id per point (-1 for padding)
       w_ref   : [IN+4, 128]     fused weight (proj | coord passthrough | count col)
       out_ref : [M_pad, 128]    resident accumulator -> segment means on last step
    """
    i = pl.program_id(0)

    @pl.when(i == 0)
    def _init():
        out_ref[...] = jnp.zeros_like(out_ref)

    # single MXU matmul: projection + coord pass-through + count column
    y = jnp.dot(x_ref[...].astype(jnp.bfloat16), w_ref[...].astype(jnp.bfloat16),
                preferred_element_type=jnp.float32)                    # [T, 128]
    col = jax.lax.broadcasted_iota(jnp.int32, y.shape, 1)
    # ReLU only on the projected feature channels (coords/counts pass through)
    y = jnp.where(col < c_relu, jnp.maximum(y, 0.0), y)

    # build the per-tile one-hot in-register from int32 ids (no [M, N] HBM array)
    m_pad = out_ref.shape[0]
    tile_n = ids_ref.shape[1]
    onehot = (jax.lax.broadcasted_iota(jnp.int32, (m_pad, tile_n), 0)
              == ids_ref[...]).astype(jnp.bfloat16)                    # [M_pad, T]

    out_ref[...] += jax.lax.dot_general(
        onehot, y.astype(jnp.bfloat16), (((1,), (0,)), ((), ())),
        preferred_element_type=jnp.float32)                            # [M_pad, 128]

    @pl.when(i == pl.num_programs(0) - 1)
    def _finalize():
        acc = out_ref[...]
        counts = acc[:, c_relu + 3:c_relu + 4]                         # count column
        out_ref[...] = acc / jnp.maximum(counts, 1.0)                  # segment means


def pooled_superpoints(ids, x_aug, w_pool, m_pad, media, tile_n):
    n_pad = x_aug.shape[0]
    grid = (n_pad // tile_n,)
    kernel = functools.partial(pool_kernel, c_relu=media)
    return pl.pallas_call(
        kernel,
        grid=grid,
        in_specs=[
            pl.BlockSpec((1, tile_n), lambda i: (0, i)),               # ids
            pl.BlockSpec((tile_n, x_aug.shape[1]), lambda i: (i, 0)),  # points
            pl.BlockSpec(tuple(w_pool.shape), lambda i: (0, 0)),       # fused weight
        ],
        out_specs=pl.BlockSpec((m_pad, SLAB), lambda i: (0, 0)),
        out_shape=jax.ShapeDtypeStruct((m_pad, SLAB), jnp.float32),
        compiler_params=pltpu.CompilerParams(
            dimension_semantics=("arbitrary",),          # reduction over N tiles
            vmem_limit_bytes=32 * 1024 * 1024),          # explicit budget (v7x-safe)
    )(ids, x_aug, w_pool)


# ----------------------------------------------------------------------------
# Kernel 2: fused decoder heads + predict_by_feat preparation
# ----------------------------------------------------------------------------
def decoder_predict_kernel(q_ref, sp_ref, wsp_ref, whead_ref,
                           misc_ref, maskbin_ref, ious_ref, *, num_class):
    """q_ref      : [Q_pad, 128]  queries | bias lane | zero pad
       sp_ref     : [M_pad, 128]  pooled superpoint slab (feats | coords | count)
       wsp_ref    : [128, 128]    identity + positional weight (coords -> feat space)
       whead_ref  : [128, 128]    class logits | score logit (bias via ones lane)
       misc_ref   : [Q_pad, 128]  lanes :K = class scores, K = nms score, K+1 = mqual
       maskbin_ref: [Q_pad, M_pad] int8 binarized superpoint masks
       ious_ref   : [Q_pad, Q_pad] cross-IoU matrix
    """
    K = num_class
    q = q_ref[...].astype(jnp.bfloat16)                                # [Qp, 128]

    # sp = sp_feats + coords @ w_pos (one matmul over the packed slab)
    sp = jnp.dot(sp_ref[...].astype(jnp.bfloat16), wsp_ref[...].astype(jnp.bfloat16),
                 preferred_element_type=jnp.float32)                   # [Mp, 128]

    # fused class-logit + query-score head (bias via the ones lane of q)
    head = jnp.dot(q, whead_ref[...].astype(jnp.bfloat16),
                   preferred_element_type=jnp.float32)                 # [Qp, 128]

    # mask logits = q @ sp^T without an explicit transpose (contract last dims)
    masks = jax.lax.dot_general(q, sp.astype(jnp.bfloat16),
                                (((1,), (1,)), ((), ())),
                                preferred_element_type=jnp.float32)    # [Qp, Mp]

    lane = jax.lax.broadcasted_iota(jnp.int32, head.shape, 1)          # [Qp, 128]
    is_cls = lane <= K                       # K+1 class logits (incl. background)
    is_fg = lane < K                         # foreground classes only

    logits = jnp.where(is_cls, head, -1e30)
    lmax = jnp.max(logits, axis=-1, keepdims=True)
    e = jnp.where(is_cls, jnp.exp(logits - lmax), 0.0)
    sm = e * pl.reciprocal(jnp.sum(e, axis=-1, keepdims=True), approx=True)

    score_logit = jnp.sum(jnp.where(lane == K + 1, head, 0.0), axis=-1, keepdims=True)
    qsc = jax.nn.sigmoid(score_logit)                                  # [Qp, 1]
    scores = jnp.where(is_fg, sm, 0.0) * qsc                           # [Qp, 128]

    mgt = masks > 0.0
    mbin = mgt.astype(jnp.float32)                                     # [Qp, Mp]
    mbin_b = mbin.astype(jnp.bfloat16)                                 # exact 0/1
    inter = jax.lax.dot_general(mbin_b, mbin_b, (((1,), (1,)), ((), ())),
                                preferred_element_type=jnp.float32)    # [Qp, Qp]
    pn = jnp.sum(mbin, axis=1, keepdims=True)                          # [Qp, 1]
    ious_ref[...] = inter * pl.reciprocal(pn + pn.T - inter + 1e-6, approx=True)

    nms = jnp.max(scores, axis=-1, keepdims=True)
    nms = jnp.where(pn == 0.0, 0.0, nms)
    mqual = (jnp.sum(jax.nn.sigmoid(masks) * mbin, axis=1, keepdims=True)
             * pl.reciprocal(pn + 1e-6, approx=True))

    misc = scores
    misc = jnp.where(lane == K, nms, misc)
    misc = jnp.where(lane == K + 1, mqual, misc)
    misc_ref[...] = misc                                               # lane-dense
    maskbin_ref[...] = mgt.astype(jnp.int8)                            # 1/4 the bytes


def decode_and_prep(q_slab, sp_slab, w_sp, w_head, num_class):
    q_pad = q_slab.shape[0]
    m_pad = sp_slab.shape[0]
    kernel = functools.partial(decoder_predict_kernel, num_class=num_class)

    def fullspec(shape):
        nd = len(shape)
        return pl.BlockSpec(shape, lambda i, _nd=nd: (0,) * _nd)

    out_shapes = [
        jax.ShapeDtypeStruct((q_pad, SLAB), jnp.float32),   # packed scores/nms/mqual
        jax.ShapeDtypeStruct((q_pad, m_pad), jnp.int8),     # binary superpoint masks
        jax.ShapeDtypeStruct((q_pad, q_pad), jnp.float32),  # cross IoUs (tiny)
    ]
    return pl.pallas_call(
        kernel,
        grid=(1,),
        in_specs=[fullspec(tuple(a.shape)) for a in (q_slab, sp_slab, w_sp, w_head)],
        out_specs=[fullspec(tuple(s.shape)) for s in out_shapes],
        out_shape=out_shapes,
        compiler_params=pltpu.CompilerParams(
            dimension_semantics=("arbitrary",),
            vmem_limit_bytes=32 * 1024 * 1024),
    )(q_slab, sp_slab, w_sp, w_head)


# ----------------------------------------------------------------------------
# Host-side NMS (sequential, data-dependent -> stays in numpy like the reference)
# ----------------------------------------------------------------------------
def non_max_suppression(ious, scores, threshold):
    ixs = scores.argsort()[::-1]
    pick = []
    while len(ixs) > 0:
        i = ixs[0]
        pick.append(i)
        iou = ious[i, ixs[1:]]
        remove_ixs = np.where(iou > threshold)[0] + 1
        ixs = np.delete(ixs, remove_ixs)
        ixs = np.delete(ixs, 0)
    return np.array(pick, dtype=np.int32)


# ----------------------------------------------------------------------------
# MAFT (predict path) with Pallas hot paths
# ----------------------------------------------------------------------------
class MAFTPallas:
    def __init__(self, input_channel=6, media=32, num_class=18, num_query=8,
                 test_cfg=None, seed=0, tile_n=512):
        assert media + 4 <= SLAB and num_class + 2 <= SLAB
        self.input_channel = input_channel
        self.media = media
        self.num_class = num_class
        self.num_query = num_query
        self.test_cfg = test_cfg or dict(topk_insts=8, score_thr=0.0, npoint_thr=0)
        self.tile_n = tile_n

        key = jax.random.PRNGKey(seed)
        k0, k1, k2, k3, k4 = jax.random.split(key, 5)
        s = 0.2
        f32 = jnp.float32
        w_in = jax.random.normal(k0, (input_channel, media), f32) * s
        queries = jax.random.normal(k1, (num_query, media), f32) * s
        w_pos = jax.random.normal(k2, (3, media), f32) * s
        w_cls = jax.random.normal(k3, (media, num_class + 1), f32) * s
        b_cls = jnp.zeros((num_class + 1,), f32)
        w_sc = jax.random.normal(k4, (media, 1), f32) * s
        b_sc = jnp.float32(0.0)

        # ---- fused pooling weight: [feats|coords|1] -> [proj|coords|count|0] ----
        aug_in = input_channel + 4
        w_pool = jnp.zeros((aug_in, SLAB), f32)
        w_pool = w_pool.at[:input_channel, :media].set(w_in)
        w_pool = w_pool.at[input_channel:input_channel + 3,
                           media:media + 3].set(jnp.eye(3, dtype=f32))
        w_pool = w_pool.at[input_channel + 3, media + 3].set(1.0)
        self.w_pool = w_pool

        # ---- queries packed in a lane-dense slab with a ones "bias" lane ----
        # Pad query rows to a multiple of 32 so the int8 mask slab is natively tiled.
        q_pad = _round_up(max(num_query, 1), 32)
        q_slab = jnp.zeros((q_pad, SLAB), f32)
        q_slab = q_slab.at[:num_query, :media].set(queries)
        q_slab = q_slab.at[:num_query, media].set(1.0)
        self.q_slab = q_slab
        self.q_pad = q_pad

        # ---- superpoint slab -> feature space: sp_feats + coords @ w_pos ----
        w_sp = jnp.zeros((SLAB, SLAB), f32)
        w_sp = w_sp.at[:media, :media].set(jnp.eye(media, dtype=f32))
        w_sp = w_sp.at[media:media + 3, :media].set(w_pos)
        self.w_sp = w_sp

        # ---- fused head weight: class logits | score logit, biases on ones lane ----
        w_head = jnp.zeros((SLAB, SLAB), f32)
        w_head = w_head.at[:media, :num_class + 1].set(w_cls)
        w_head = w_head.at[:media, num_class + 1].set(w_sc[:, 0])
        w_head = w_head.at[media, :num_class + 1].set(b_cls)
        w_head = w_head.at[media, num_class + 1].set(b_sc)
        self.w_head = w_head

    # extract_feat + scatter_mean pooling of feats and coords, fully fused
    def predict(self, feats, coords_float, superpoints, num_sp, scan_id):
        n = feats.shape[0]
        tile_n = self.tile_n
        n_pad = _round_up(max(n, tile_n), tile_n)
        m_pad = _round_up(max(num_sp, 1), 128)

        ones = jnp.ones((n, 1), jnp.float32)
        x_aug = jnp.concatenate(
            [feats.astype(jnp.float32), coords_float.astype(jnp.float32), ones], axis=1)
        x_aug = jnp.pad(x_aug, ((0, n_pad - n), (0, 0)))
        ids = jnp.pad(superpoints.astype(jnp.int32), (0, n_pad - n),
                      constant_values=-1).reshape(1, n_pad)

        sp_slab = pooled_superpoints(ids, x_aug, self.w_pool, m_pad,
                                     self.media, tile_n)
        misc, maskbin, ious = decode_and_prep(self.q_slab, sp_slab,
                                              self.w_sp, self.w_head,
                                              self.num_class)
        misc, maskbin, ious = jax.block_until_ready((misc, maskbin, ious))
        return self.predict_by_feat(scan_id, misc, maskbin, ious,
                                    np.asarray(superpoints), num_sp)

    def predict_by_feat(self, scan_id, misc, maskbin, ious, superpoints, num_sp):
        K, Q = self.num_class, self.num_query
        misc = np.asarray(misc)
        maskbin = np.asarray(maskbin)
        ious = np.asarray(ious)

        scores = misc[:Q, :K]              # softmax(labels)[:, :-1] * pred_scores
        nms_score = misc[:Q, K]
        mqual = misc[:Q, K + 1]
        ious = ious[:Q, :Q]
        mask_bin = maskbin[:Q, :num_sp]

        # ------ host-side post-processing (data-dependent shapes) ------
        pick = non_max_suppression(ious, nms_score, 0.75)
        scores = scores[pick]
        mask_bin = mask_bin[pick]
        mqual = mqual[pick]

        num_pick = scores.shape[0]
        labels_flat = np.tile(np.arange(K), (num_pick, 1)).reshape(-1)
        flat = scores.reshape(-1)
        topk = min(int(self.test_cfg["topk_insts"]), flat.size)
        topk_idx = np.argpartition(-flat, topk - 1)[:topk]   # topk(sorted=False)
        scores_k = flat[topk_idx]
        labels_k = labels_flat[topk_idx] + 1
        row = topk_idx // K

        mask_pred = mask_bin[row]
        mask_scores = mqual[row]
        scores_k = scores_k * mask_scores
        mask_pred_pts = mask_pred[:, superpoints].astype(np.int32)

        keep = scores_k > self.test_cfg["score_thr"]
        scores_k, labels_k, mask_pred_pts = (
            scores_k[keep], labels_k[keep], mask_pred_pts[keep])
        keep = mask_pred_pts.sum(1) > self.test_cfg["npoint_thr"]
        scores_k, labels_k, mask_pred_pts = (
            scores_k[keep], labels_k[keep], mask_pred_pts[keep])

        pred_instances = []
        for i in range(scores_k.shape[0]):
            pred_instances.append(dict(
                scan_id=scan_id,
                label_id=int(labels_k[i]),
                conf=float(scores_k[i]),
                # TODO(synk): rle_encode not provided; return raw binary point mask.
                pred_mask=mask_pred_pts[i],
            ))
        return dict(scan_id=scan_id, pred_instances=pred_instances, gt_instances=None)


# ----------------------------------------------------------------------------

if __name__ == "__main__":
    key = jax.random.PRNGKey(0)
    N, M, Q = 64, 32, 8
    k1, k2, k3 = jax.random.split(key, 3)
    feats = jax.random.normal(k1, (N, 6), jnp.float32)          # point features
    coords_float = jax.random.uniform(k2, (N, 3), jnp.float32)  # point coordinates
    superpoints = jax.random.randint(k3, (N,), 0, M)            # superpoint id / point

    model = MAFTPallas(input_channel=6, media=32, num_class=18, num_query=Q,
                       test_cfg=dict(topk_insts=8, score_thr=0.0, npoint_thr=0),
                       seed=0, tile_n=512)
    ret = model.predict(feats, coords_float, superpoints, num_sp=M,
                        scan_id="scene0000_00")
    assert "pred_instances" in ret
    print("KERNEL_OK")
</pallas_src>

<mosaic_0001>
module attributes {stable_mosaic.version = 11 : i64} {
  func.func @pool_kernel(%arg0: i32, %arg1: memref<1x512xi32, #tpu.memory_space<vmem>>, %arg2: memref<512x10xf32, #tpu.memory_space<vmem>>, %arg3: memref<10x128xf32, #tpu.memory_space<vmem>>, %arg4: memref<128x128xf32, #tpu.memory_space<vmem>>) attributes {dimension_semantics = [#tpu.dimension_semantics<arbitrary>], iteration_bounds = array<i64: 1>, scalar_prefetch = 0 : i64, scratch_operands = 0 : i64, tpu.core_type = #tpu.core_type<tc>, window_params = [{transform_indices = @transform_0, window_bounds = array<i64: 1, 512>}, {transform_indices = @transform_1, window_bounds = array<i64: 512, 10>}, {pipeline_mode = #tpu.pipeline_mode<synchronous>, transform_indices = @transform_2, window_bounds = array<i64: 10, 128>}, {pipeline_mode = #tpu.pipeline_mode<synchronous>, transform_indices = @transform_3, window_bounds = array<i64: 128, 128>}]} {
    %c0_i32 = arith.constant 0 : i32
    %0 = arith.cmpi eq, %arg0, %c0_i32 : i32
    %1 = arith.extui %0 : i1 to i32
    %c0_i32_0 = arith.constant 0 : i32
    %2 = arith.cmpi ne, %1, %c0_i32_0 : i32
    scf.if %2 {
      %cst_14 = arith.constant 0.000000e+00 : f32
      %29 = vector.broadcast %cst_14 : f32 to vector<128x128xf32>
      %c0_15 = arith.constant 0 : index
      %c0_16 = arith.constant 0 : index
      %30 = vector.load %arg4[%c0_15, %c0_16] : memref<128x128xf32, #tpu.memory_space<vmem>>, vector<128x128xf32>
      tpu.vector_store %arg4[%c0_15, %c0_16], %29 {strides = array<i32>} : memref<128x128xf32, #tpu.memory_space<vmem>>, vector<128x128xf32>,
    } else {
    }
    %c0 = arith.constant 0 : index
    %c0_1 = arith.constant 0 : index
    %3 = vector.load %arg2[%c0, %c0_1] : memref<512x10xf32, #tpu.memory_space<vmem>>, vector<512x10xf32>
    %4 = arith.truncf %3 : vector<512x10xf32> to vector<512x10xbf16>
    %c0_2 = arith.constant 0 : index
    %c0_3 = arith.constant 0 : index
    %5 = vector.load %arg3[%c0_2, %c0_3] : memref<10x128xf32, #tpu.memory_space<vmem>>, vector<10x128xf32>
    %6 = arith.truncf %5 : vector<10x128xf32> to vector<10x128xbf16>
    %cst = arith.constant dense<0.000000e+00> : vector<512x128xf32>
    %7 = tpu.matmul %4, %6, %cst {dimension_numbers = #tpu.dot_dimension_numbers<[1], [0], [0], [1], [0, 0, 1, 1], [], []>} : vector<512x10xbf16>, vector<10x128xbf16>, vector<512x128xf32> -> vector<512x128xf32>
    %8 = tpu.iota {dimensions = array<i32: 1>} : vector<512x128xi32>
    %c32_i32 = arith.constant 32 : i32
    %9 = vector.broadcast %c32_i32 : i32 to vector<512x128xi32>
    %10 = arith.cmpi slt, %8, %9 : vector<512x128xi32>
    %cst_4 = arith.constant 0.000000e+00 : f32
    %11 = vector.broadcast %cst_4 : f32 to vector<512x128xf32>
    %12 = arith.maximumf %7, %11 : vector<512x128xf32>
    %13 = arith.select %10, %12, %7 : vector<512x128xi1>, vector<512x128xf32>
    %14 = tpu.iota {dimensions = array<i32: 0>} : vector<128x512xi32>
    %c0_5 = arith.constant 0 : index
    %c0_6 = arith.constant 0 : index
    %15 = vector.load %arg1[%c0_5, %c0_6] : memref<1x512xi32, #tpu.memory_space<vmem>>, vector<1x512xi32>
    %16 = vector.broadcast %15 : vector<1x512xi32> to vector<128x512xi32>
    %17 = arith.cmpi eq, %14, %16 : vector<128x512xi32>
    %18 = arith.extui %17 : vector<128x512xi1> to vector<128x512xi32>
    %19 = arith.sitofp %18 : vector<128x512xi32> to vector<128x512xf32>
    %20 = arith.truncf %19 : vector<128x512xf32> to vector<128x512xbf16>
    %c0_7 = arith.constant 0 : index
    %c0_8 = arith.constant 0 : index
    %21 = vector.load %arg4[%c0_7, %c0_8] : memref<128x128xf32, #tpu.memory_space<vmem>>, vector<128x128xf32>
    %22 = arith.truncf %13 : vector<512x128xf32> to vector<512x128xbf16>
    %cst_9 = arith.constant dense<0.000000e+00> : vector<128x128xf32>
    %23 = tpu.matmul %20, %22, %cst_9 {dimension_numbers = #tpu.dot_dimension_numbers<[1], [0], [0], [1], [0, 0, 1, 1], [], []>} : vector<128x512xbf16>, vector<512x128xbf16>, vector<128x128xf32> -> vector<128x128xf32>
    %24 = arith.addf %21, %23 : vector<128x128xf32>
    %c0_10 = arith.constant 0 : index
    %c0_11 = arith.constant 0 : index
    %25 = vector.load %arg4[%c0_10, %c0_11] : memref<128x128xf32, #tpu.memory_space<vmem>>, vector<128x128xf32>
    tpu.vector_store %arg4[%c0_10, %c0_11], %24 {strides = array<i32>} : memref<128x128xf32, #tpu.memory_space<vmem>>, vector<128x128xf32>,
    %c0_i32_12 = arith.constant 0 : i32
    %26 = arith.cmpi eq, %arg0, %c0_i32_12 : i32
    %27 = arith.extui %26 : i1 to i32
    %c0_i32_13 = arith.constant 0 : i32
    %28 = arith.cmpi ne, %27, %c0_i32_13 : i32
    scf.if %28 {
      %c0_14 = arith.constant 0 : index
      %c0_15 = arith.constant 0 : index
      %29 = vector.load %arg4[%c0_14, %c0_15] : memref<128x128xf32, #tpu.memory_space<vmem>>, vector<128x128xf32>
      %30 = vector.extract_strided_slice %29 {offsets = [0, 35], sizes = [128, 1], strides = [1, 1]} : vector<128x128xf32> to vector<128x1xf32>
      %cst_16 = arith.constant 1.000000e+00 : f32
      %31 = vector.broadcast %cst_16 : f32 to vector<128x1xf32>
      %32 = arith.maximumf %30, %31 : vector<128x1xf32>
      %33 = vector.broadcast %32 : vector<128x1xf32> to vector<128x128xf32>
      %34 = arith.divf %29, %33 : vector<128x128xf32>
      %c0_17 = arith.constant 0 : index
      %c0_18 = arith.constant 0 : index
      %35 = vector.load %arg4[%c0_17, %c0_18] : memref<128x128xf32, #tpu.memory_space<vmem>>, vector<128x128xf32>
      tpu.vector_store %arg4[%c0_17, %c0_18], %34 {strides = array<i32>} : memref<128x128xf32, #tpu.memory_space<vmem>>, vector<128x128xf32>,
    } else {
    }
    return
  }
  func.func @transform_0(%arg0: i32) -> (i32, i32) {
    %c0_i32 = arith.constant 0 : i32
    %c0_i32_0 = arith.constant 0 : i32
    return %c0_i32, %arg0 : i32, i32
  }
  func.func @transform_1(%arg0: i32) -> (i32, i32) {
    %c0_i32 = arith.constant 0 : i32
    %c0_i32_0 = arith.constant 0 : i32
    return %arg0, %c0_i32 : i32, i32
  }
  func.func @transform_2(%arg0: i32) -> (i32, i32) {
    %c0_i32 = arith.constant 0 : i32
    %c0_i32_0 = arith.constant 0 : i32
    %c0_i32_1 = arith.constant 0 : i32
    return %c0_i32, %c0_i32_0 : i32, i32
  }
  func.func @transform_3(%arg0: i32) -> (i32, i32) {
    %c0_i32 = arith.constant 0 : i32
    %c0_i32_0 = arith.constant 0 : i32
    %c0_i32_1 = arith.constant 0 : i32
    return %c0_i32, %c0_i32_0 : i32, i32
  }
}

</mosaic_0001>

<llo_original>
// kernel: tpu_custom_call.1
$region0: #{tpu_custom_call.1}
  #allocation0 [shape = 'u32[]', space=smem, size = 0x4, offset = 0x4, fixed_abs, tag = 'smem constant byte address 0x4 - core index']
  #allocation1 [shape = 'u32[144,128]{1,0:T(1,128)}', space=vmem, size = 0x12000, scoped, tag = 'internal scratch']
  %s0 = inlined_call_operand.vmem [shape: s32[1,512], index: 0, kind: input, shape index: {}]
  %s1 = inlined_call_operand.vmem [shape: f32[512,10], index: 1, kind: input, shape index: {}]
  %s2 = inlined_call_operand.vmem [shape: f32[10,128], index: 2, kind: input, shape index: {}]
  %s3 = inlined_call_operand.hbm [shape: f32[128,128], index: 3, kind: output, shape index: {}]
  %s4 = sld [smem:[#allocation0]]
  $region30: #{tpu_custom_call.1} parent=0
    _
  %s6 = ssub.s32 1, %s4
  %s7 = scalar_select 0, %s6, %s4
  $region1: #{tpu_custom_call.1} parent=0
    #allocation2 [shape = 'u8[65536]{0}', space=vmem, size = 0x10000, scoped, tag = 'output window, operand 0, single buffered']
    #allocation3 [shape = 's32[1]{0}', space=sflag, size = 0x4, scoped, tag = 'scoped memory for tpu_custom_call.1']
    %8 = vsyncpa [#allocation3], 0
    // Predicated region
    $region2: #{tpu_custom_call.1} parent=1 // pred_check
      _
    $region3: #{tpu_custom_call.1} parent=1 // pred_check_branch
      %10 = sbr.rel (0) target = $region5
    $region4: #{tpu_custom_call.1} parent=1 // pred_region
      _
    $region5: #{tpu_custom_call.1} parent=1 // pred_fallthru
      _
    // Predicated region
    $region6: #{tpu_custom_call.1} parent=1 // pred_check
      _
    $region7: #{tpu_custom_call.1} parent=1 // pred_check_branch
      %12 = sbr.rel (0) target = $region9
    $region8: #{tpu_custom_call.1} parent=1 // pred_region
      _
    $region9: #{tpu_custom_call.1} parent=1 // pred_fallthru
      _
    // Predicated region
    $region10: #{tpu_custom_call.1} parent=1 // pred_check
      _
    $region11: #{tpu_custom_call.1} parent=1 // pred_check_branch
      %14 = sbr.rel (0) target = $region13
    $region12: #{tpu_custom_call.1} parent=1 // pred_region
      _
    $region13: #{tpu_custom_call.1} parent=1 // pred_fallthru
      _
    %p16 = scmp.eq.s32.totalorder 0, 0
    // Predicated region
    $region14: #{tpu_custom_call.1} parent=1 // pred_check
      %p17 = pneg %p16
    $region15: #{tpu_custom_call.1} parent=1 // pred_check_branch
      %19 = sbr.rel (%p17) target = $region17
    $region16: #{tpu_custom_call.1} parent=1 // pred_region
      %20 = vst [vmem:[#allocation2] sm:$0xff] 0.0
      %21 = vst [vmem:[#allocation2 + $0x8] sm:$0xff] 0.0
      %22 = vst [vmem:[#allocation2 + $0x10] sm:$0xff] 0.0
      %23 = vst [vmem:[#allocation2 + $0x18] sm:$0xff] 0.0
      %24 = vst [vmem:[#allocation2 + $0x20] sm:$0xff] 0.0
      %25 = vst [vmem:[#allocation2 + $0x28] sm:$0xff] 0.0
      %26 = vst [vmem:[#allocation2 + $0x30] sm:$0xff] 0.0
      %27 = vst [vmem:[#allocation2 + $0x38] sm:$0xff] 0.0
      %28 = vst [vmem:[#allocation2 + $0x40] sm:$0xff] 0.0
      %29 = vst [vmem:[#allocation2 + $0x48] sm:$0xff] 0.0
      %30 = vst [vmem:[#allocation2 + $0x50] sm:$0xff] 0.0
      %31 = vst [vmem:[#allocation2 + $0x58] sm:$0xff] 0.0
      %32 = vst [vmem:[#allocation2 + $0x60] sm:$0xff] 0.0
      %33 = vst [vmem:[#allocation2 + $0x68] sm:$0xff] 0.0
      %34 = vst [vmem:[#allocation2 + $0x70] sm:$0xff] 0.0
      %35 = vst [vmem:[#allocation2 + $0x78] sm:$0xff] 0.0
    $region17: #{tpu_custom_call.1} parent=1 // pred_fallthru
      _
    %v36 = vld [vmem:[%s1] sm:$0xff]
    %v37 = vld [vmem:[%s1 + $0x8] sm:$0xff]
    %v38 = vld [vmem:[%s1 + $0x10] sm:$0xff]
    %v39 = vld [vmem:[%s1 + $0x18] sm:$0xff]
    %v40 = vld [vmem:[%s1 + $0x20] sm:$0xff]
    %v41 = vld [vmem:[%s1 + $0x28] sm:$0xff]
    %v42 = vld [vmem:[%s1 + $0x30] sm:$0xff]
    %v43 = vld [vmem:[%s1 + $0x38] sm:$0xff]
    %v44 = vld [vmem:[%s1 + $0x40] sm:$0xff]
    %v45 = vld [vmem:[%s1 + $0x48] sm:$0xff]
    %v46 = vld [vmem:[%s1 + $0x50] sm:$0xff]
    %v47 = vld [vmem:[%s1 + $0x58] sm:$0xff]
    %v48 = vld [vmem:[%s1 + $0x60] sm:$0xff]
    %v49 = vld [vmem:[%s1 + $0x68] sm:$0xff]
    %v50 = vld [vmem:[%s1 + $0x70] sm:$0xff]
    %v51 = vld [vmem:[%s1 + $0x78] sm:$0xff]
    %v52 = vld [vmem:[%s1 + $0x80] sm:$0xff]
    %v53 = vld [vmem:[%s1 + $0x88] sm:$0xff]
    %v54 = vld [vmem:[%s1 + $0x90] sm:$0xff]
    %v55 = vld [vmem:[%s1 + $0x98] sm:$0xff]
    %v56 = vld [vmem:[%s1 + $0xa0] sm:$0xff]
    %v57 = vld [vmem:[%s1 + $0xa8] sm:$0xff]
    %v58 = vld [vmem:[%s1 + $0xb0] sm:$0xff]
    %v59 = vld [vmem:[%s1 + $0xb8] sm:$0xff]
    %v60 = vld [vmem:[%s1 + $0xc0] sm:$0xff]
    %v61 = vld [vmem:[%s1 + $0xc8] sm:$0xff]
    %v62 = vld [vmem:[%s1 + $0xd0] sm:$0xff]
    %v63 = vld [vmem:[%s1 + $0xd8] sm:$0xff]
    %v64 = vld [vmem:[%s1 + $0xe0] sm:$0xff]
    %v65 = vld [vmem:[%s1 + $0xe8] sm:$0xff]
    %v66 = vld [vmem:[%s1 + $0xf0] sm:$0xff]
    %v67 = vld [vmem:[%s1 + $0xf8] sm:$0xff]
    %v68 = vld [vmem:[%s1 + $0x100] sm:$0xff]
    %v69 = vld [vmem:[%s1 + $0x108] sm:$0xff]
    %v70 = vld [vmem:[%s1 + $0x110] sm:$0xff]
    %v71 = vld [vmem:[%s1 + $0x118] sm:$0xff]
    %v72 = vld [vmem:[%s1 + $0x120] sm:$0xff]
    %v73 = vld [vmem:[%s1 + $0x128] sm:$0xff]
    %v74 = vld [vmem:[%s1 + $0x130] sm:$0xff]
    %v75 = vld [vmem:[%s1 + $0x138] sm:$0xff]
    %v76 = vld [vmem:[%s1 + $0x140] sm:$0xff]
    %v77 = vld [vmem:[%s1 + $0x148] sm:$0xff]
    %v78 = vld [vmem:[%s1 + $0x150] sm:$0xff]
    %v79 = vld [vmem:[%s1 + $0x158] sm:$0xff]
    %v80 = vld [vmem:[%s1 + $0x160] sm:$0xff]
    %v81 = vld [vmem:[%s1 + $0x168] sm:$0xff]
    %v82 = vld [vmem:[%s1 + $0x170] sm:$0xff]
    %v83 = vld [vmem:[%s1 + $0x178] sm:$0xff]
    %v84 = vld [vmem:[%s1 + $0x180] sm:$0xff]
    %v85 = vld [vmem:[%s1 + $0x188] sm:$0xff]
    %v86 = vld [vmem:[%s1 + $0x190] sm:$0xff]
    %v87 = vld [vmem:[%s1 + $0x198] sm:$0xff]
    %v88 = vld [vmem:[%s1 + $0x1a0] sm:$0xff]
    %v89 = vld [vmem:[%s1 + $0x1a8] sm:$0xff]
    %v90 = vld [vmem:[%s1 + $0x1b0] sm:$0xff]
    %v91 = vld [vmem:[%s1 + $0x1b8] sm:$0xff]
    %v92 = vld [vmem:[%s1 + $0x1c0] sm:$0xff]
    %v93 = vld [vmem:[%s1 + $0x1c8] sm:$0xff]
    %v94 = vld [vmem:[%s1 + $0x1d0] sm:$0xff]
    %v95 = vld [vmem:[%s1 + $0x1d8] sm:$0xff]
    %v96 = vld [vmem:[%s1 + $0x1e0] sm:$0xff]
    %v97 = vld [vmem:[%s1 + $0x1e8] sm:$0xff]
    %v98 = vld [vmem:[%s1 + $0x1f0] sm:$0xff]
    %v99 = vld [vmem:[%s1 + $0x1f8] sm:$0xff]
    %v100 = vpack.c.bf16 %v37, %v36
    %v101 = vpack.c.bf16 %v39, %v38
    %v102 = vpack.c.bf16 %v41, %v40
    %v103 = vpack.c.bf16 %v43, %v42
    %v104 = vpack.c.bf16 %v45, %v44
    %v105 = vpack.c.bf16 %v47, %v46
    %v106 = vpack.c.bf16 %v49, %v48
    %v107 = vpack.c.bf16 %v51, %v50
    %v108 = vpack.c.bf16 %v53, %v52
    %v109 = vpack.c.bf16 %v55, %v54
    %v110 = vpack.c.bf16 %v57, %v56
    %v111 = vpack.c.bf16 %v59, %v58
    %v112 = vpack.c.bf16 %v61, %v60
    %v113 = vpack.c.bf16 %v63, %v62
    %v114 = vpack.c.bf16 %v65, %v64
    %v115 = vpack.c.bf16 %v67, %v66
    %v116 = vpack.c.bf16 %v69, %v68
    %v117 = vpack.c.bf16 %v71, %v70
    %v118 = vpack.c.bf16 %v73, %v72
    %v119 = vpack.c.bf16 %v75, %v74
    %v120 = vpack.c.bf16 %v77, %v76
    %v121 = vpack.c.bf16 %v79, %v78
    %v122 = vpack.c.bf16 %v81, %v80
    %v123 = vpack.c.bf16 %v83, %v82
    %v124 = vpack.c.bf16 %v85, %v84
    %v125 = vpack.c.bf16 %v87, %v86
    %v126 = vpack.c.bf16 %v89, %v88
    %v127 = vpack.c.bf16 %v91, %v90
    %v128 = vpack.c.bf16 %v93, %v92
    %v129 = vpack.c.bf16 %v95, %v94
    %v130 = vpack.c.bf16 %v97, %v96
    %v131 = vpack.c.bf16 %v99, %v98
    %v132 = vld [vmem:[%s2] sm:$0xff]
    %v133 = vld [vmem:[%s2 + $0x8] sm:$0x3]
    %v134 = vpack.c.bf16 %v133, %v132
    %vm135 = vcmask 80896
    %v137 = vsel %vm135, %v100, 0
    %v140 = vsel %vm135, %v101, 0
    %v143 = vsel %vm135, %v102, 0
    %v146 = vsel %vm135, %v103, 0
    %v149 = vsel %vm135, %v104, 0
    %v152 = vsel %vm135, %v105, 0
    %v155 = vsel %vm135, %v106, 0
    %v158 = vsel %vm135, %v107, 0
    %v161 = vsel %vm135, %v108, 0
    %v164 = vsel %vm135, %v109, 0
    %v167 = vsel %vm135, %v110, 0
    %v170 = vsel %vm135, %v111, 0
    %v173 = vsel %vm135, %v112, 0
    %v176 = vsel %vm135, %v113, 0
    %v179 = vsel %vm135, %v114, 0
    %v182 = vsel %vm135, %v115, 0
    %v185 = vsel %vm135, %v116, 0
    %v188 = vsel %vm135, %v117, 0
    %v191 = vsel %vm135, %v118, 0
    %v194 = vsel %vm135, %v119, 0
    %v197 = vsel %vm135, %v120, 0
    %v200 = vsel %vm135, %v121, 0
    %v203 = vsel %vm135, %v122, 0
    %v206 = vsel %vm135, %v123, 0
    %v209 = vsel %vm135, %v124, 0
    %v212 = vsel %vm135, %v125, 0
    %v215 = vsel %vm135, %v126, 0
    %v218 = vsel %vm135, %v127, 0
    %v221 = vsel %vm135, %v128, 0
    %v224 = vsel %vm135, %v129, 0
    %v227 = vsel %vm135, %v130, 0
    %v230 = vsel %vm135, %v131, 0
    %vm232 = vcmask 1044480
    %v234 = vsel %vm232, %v134, 0
    %236 = vmatprep.subr.bf16.mxu0 0
    %237 = vmatpush1.bf16.msra.mxu0 %v234
    %238 = vmatprep.subr.bf16.mxu0 0
    %239 = vmatpush1.bf16.msra.mxu0 0
    %240 = vmatprep.subr.bf16.mxu0 0
    %241 = vmatpush1.bf16.msra.mxu0 0
    %242 = vmatprep.subr.bf16.mxu0 0
    %243 = vmatpush1.bf16.msra.mxu0 0
    %244 = vmatprep.subr.bf16.mxu0 0
    %245 = vmatpush1.bf16.msra.mxu0 0
    %246 = vmatprep.subr.bf16.mxu0 0
    %247 = vmatpush1.bf16.msra.mxu0 0
    %248 = vmatprep.subr.bf16.mxu0 0
    %249 = vmatpush1.bf16.msra.mxu0 0
    %250 = vmatprep.subr.bf16.mxu0 0
    %251 = vmatpush1.bf16.msra.mxu0 0
    %252 = vmatprep.subr.bf16.mxu0 0
    %253 = vmatpush1.bf16.msra.mxu0 0
    %254 = vmatprep.subr.bf16.mxu0 0
    %255 = vmatpush1.bf16.msra.mxu0 0
    %256 = vmatprep.subr.bf16.mxu0 0
    %257 = vmatpush1.bf16.msra.mxu0 0
    %258 = vmatprep.subr.bf16.mxu0 0
    %259 = vmatpush1.bf16.msra.mxu0 0
    %260 = vmatprep.subr.bf16.mxu0 0
    %261 = vmatpush1.bf16.msra.mxu0 0
    %262 = vmatprep.subr.bf16.mxu0 0
    %263 = vmatpush1.bf16.msra.mxu0 0
    %264 = vmatprep.subr.bf16.mxu0 0
    %265 = vmatpush1.bf16.msra.mxu0 0
    %266 = vmatprep.subr.bf16.mxu0 0
    %267 = vmatpush1.bf16.msra.mxu0 0
    %268 = vmatprep.mubr.bf16.mxu0 0
    %269 = vmatmul.mubr.bf16.gmra.mrb[0].mxu0 %v137
    %v270 = vpop.f32.mrb[0].mxu0
    %v271 = vadd.f32 0.0, %v270
    %v272 = vpop.f32.mrb[0].mxu0
    %v273 = vpop.f32.mrb[0].mxu0
    %v274 = vadd.f32 0.0, %v273
    %v275 = vpop.f32.mrb[0].mxu0
    %276 = vmatprep.mubr.bf16.mxu0 0
    %277 = vmatmul.mubr.bf16.gmra.mrb[0].mxu0 %v140
    %v278 = vpop.f32.mrb[0].mxu0
    %v279 = vadd.f32 0.0, %v278
    %v280 = vpop.f32.mrb[0].mxu0
    %v281 = vpop.f32.mrb[0].mxu0
    %v282 = vadd.f32 0.0, %v281
    %v283 = vpop.f32.mrb[0].mxu0
    %284 = vmatprep.mubr.bf16.mxu0 0
    %285 = vmatmul.mubr.bf16.gmra.mrb[0].mxu0 %v143
    %v286 = vpop.f32.mrb[0].mxu0
    %v287 = vadd.f32 0.0, %v286
    %v288 = vpop.f32.mrb[0].mxu0
    %v289 = vpop.f32.mrb[0].mxu0
    %v290 = vadd.f32 0.0, %v289
    %v291 = vpop.f32.mrb[0].mxu0
    %292 = vmatprep.mubr.bf16.mxu0 0
    %293 = vmatmul.mubr.bf16.gmra.mrb[0].mxu0 %v146
    %v294 = vpop.f32.mrb[0].mxu0
    %v295 = vadd.f32 0.0, %v294
    %v296 = vpop.f32.mrb[0].mxu0
    %v297 = vpop.f32.mrb[0].mxu0
    %v298 = vadd.f32 0.0, %v297
    %v299 = vpop.f32.mrb[0].mxu0
    %300 = vmatprep.mubr.bf16.mxu0 0
    %301 = vmatmul.mubr.bf16.gmra.mrb[0].mxu0 %v149
    %v302 = vpop.f32.mrb[0].mxu0
    %v303 = vadd.f32 0.0, %v302
    %v304 = vpop.f32.mrb[0].mxu0
    %v305 = vpop.f32.mrb[0].mxu0
    %v306 = vadd.f32 0.0, %v305
    %v307 = vpop.f32.mrb[0].mxu0
    %308 = vmatprep.mubr.bf16.mxu0 0
    %309 = vmatmul.mubr.bf16.gmra.mrb[0].mxu0 %v152
    %v310 = vpop.f32.mrb[0].mxu0
    %v311 = vadd.f32 0.0, %v310
    %v312 = vpop.f32.mrb[0].mxu0
    %v313 = vpop.f32.mrb[0].mxu0
    %v314 = vadd.f32 0.0, %v313
    %v315 = vpop.f32.mrb[0].mxu0
    %316 = vmatprep.mubr.bf16.mxu0 0
    %317 = vmatmul.mubr.bf16.gmra.mrb[0].mxu0 %v155
    %v318 = vpop.f32.mrb[0].mxu0
    %v319 = vadd.f32 0.0, %v318
    %v320 = vpop.f32.mrb[0].mxu0
    %v321 = vpop.f32.mrb[0].mxu0
    %v322 = vadd.f32 0.0, %v321
    %v323 = vpop.f32.mrb[0].mxu0
    %324 = vmatprep.mubr.bf16.mxu0 0
    %325 = vmatmul.mubr.bf16.gmra.mrb[0].mxu0 %v158
    %v326 = vpop.f32.mrb[0].mxu0
    %v327 = vadd.f32 0.0, %v326
    %v328 = vpop.f32.mrb[0].mxu0
    %v329 = vpop.f32.mrb[0].mxu0
    %v330 = vadd.f32 0.0, %v329
    %v331 = vpop.f32.mrb[0].mxu0
    %332 = vmatprep.mubr.bf16.mxu0 0
    %333 = vmatmul.mubr.bf16.gmra.mrb[0].mxu0 %v161
    %v334 = vpop.f32.mrb[0].mxu0
    %v335 = vadd.f32 0.0, %v334
    %v336 = vpop.f32.mrb[0].mxu0
    %v337 = vpop.f32.mrb[0].mxu0
    %v338 = vadd.f32 0.0, %v337
    %v339 = vpop.f32.mrb[0].mxu0
    %340 = vmatprep.mubr.bf16.mxu0 0
    %341 = vmatmul.mubr.bf16.gmra.mrb[0].mxu0 %v164
    %v342 = vpop.f32.mrb[0].mxu0
    %v343 = vadd.f32 0.0, %v342
    %v344 = vpop.f32.mrb[0].mxu0
    %v345 = vpop.f32.mrb[0].mxu0
    %v346 = vadd.f32 0.0, %v345
    %v347 = vpop.f32.mrb[0].mxu0
    %348 = vmatprep.mubr.bf16.mxu0 0
    %349 = vmatmul.mubr.bf16.gmra.mrb[0].mxu0 %v167
    %v350 = vpop.f32.mrb[0].mxu0
    %v351 = vadd.f32 0.0, %v350
    %v352 = vpop.f32.mrb[0].mxu0
    %v353 = vpop.f32.mrb[0].mxu0
    %v354 = vadd.f32 0.0, %v353
    %v355 = vpop.f32.mrb[0].mxu0
    %356 = vmatprep.mubr.bf16.mxu0 0
    %357 = vmatmul.mubr.bf16.gmra.mrb[0].mxu0 %v170
    %v358 = vpop.f32.mrb[0].mxu0
    %v359 = vadd.f32 0.0, %v358
    %v360 = vpop.f32.mrb[0].mxu0
    %v361 = vpop.f32.mrb[0].mxu0
    %v362 = vadd.f32 0.0, %v361
    %v363 = vpop.f32.mrb[0].mxu0
    %364 = vmatprep.mubr.bf16.mxu0 0
    %365 = vmatmul.mubr.bf16.gmra.mrb[0].mxu0 %v173
    %v366 = vpop.f32.mrb[0].mxu0
    %v367 = vadd.f32 0.0, %v366
    %v368 = vpop.f32.mrb[0].mxu0
    %v369 = vpop.f32.mrb[0].mxu0
    %v370 = vadd.f32 0.0, %v369
    %v371 = vpop.f32.mrb[0].mxu0
    %372 = vmatprep.mubr.bf16.mxu0 0
    %373 = vmatmul.mubr.bf16.gmra.mrb[0].mxu0 %v176
    %v374 = vpop.f32.mrb[0].mxu0
    %v375 = vadd.f32 0.0, %v374
    %v376 = vpop.f32.mrb[0].mxu0
    %v377 = vpop.f32.mrb[0].mxu0
    %v378 = vadd.f32 0.0, %v377
    %v379 = vpop.f32.mrb[0].mxu0
    %380 = vmatprep.mubr.bf16.mxu0 0
    %381 = vmatmul.mubr.bf16.gmra.mrb[0].mxu0 %v179
    %v382 = vpop.f32.mrb[0].mxu0
    %v383 = vadd.f32 0.0, %v382
    %v384 = vpop.f32.mrb[0].mxu0
    %v385 = vpop.f32.mrb[0].mxu0
    %v386 = vadd.f32 0.0, %v385
    %v387 = vpop.f32.mrb[0].mxu0
    %388 = vmatprep.mubr.bf16.mxu0 0
    %389 = vmatmul.mubr.bf16.gmra.mrb[0].mxu0 %v182
    %v390 = vpop.f32.mrb[0].mxu0
    %v391 = vadd.f32 0.0, %v390
    %v392 = vpop.f32.mrb[0].mxu0
    %v393 = vpop.f32.mrb[0].mxu0
    %v394 = vadd.f32 0.0, %v393
    %v395 = vpop.f32.mrb[0].mxu0
    %396 = vmatprep.mubr.bf16.mxu0 0
    %397 = vmatmul.mubr.bf16.gmra.mrb[0].mxu0 %v185
    %v398 = vpop.f32.mrb[0].mxu0
    %v399 = vadd.f32 0.0, %v398
    %v400 = vpop.f32.mrb[0].mxu0
    %v401 = vpop.f32.mrb[0].mxu0
    %v402 = vadd.f32 0.0, %v401
    %v403 = vpop.f32.mrb[0].mxu0
    %404 = vmatprep.mubr.bf16.mxu0 0
    %405 = vmatmul.mubr.bf16.gmra.mrb[0].mxu0 %v188
    %v406 = vpop.f32.mrb[0].mxu0
    %v407 = vadd.f32 0.0, %v406
    %v408 = vpop.f32.mrb[0].mxu0
    %v409 = vpop.f32.mrb[0].mxu0
    %v410 = vadd.f32 0.0, %v409
    %v411 = vpop.f32.mrb[0].mxu0
    %412 = vmatprep.mubr.bf16.mxu0 0
    %413 = vmatmul.mubr.bf16.gmra.mrb[0].mxu0 %v191
    %v414 = vpop.f32.mrb[0].mxu0
    %v415 = vadd.f32 0.0, %v414
    %v416 = vpop.f32.mrb[0].mxu0
    %v417 = vpop.f32.mrb[0].mxu0
    %v418 = vadd.f32 0.0, %v417
    %v419 = vpop.f32.mrb[0].mxu0
    %420 = vmatprep.mubr.bf16.mxu0 0
    %421 = vmatmul.mubr.bf16.gmra.mrb[0].mxu0 %v194
    %v422 = vpop.f32.mrb[0].mxu0
    %v423 = vadd.f32 0.0, %v422
    %v424 = vpop.f32.mrb[0].mxu0
    %v425 = vpop.f32.mrb[0].mxu0
    %v426 = vadd.f32 0.0, %v425
    %v427 = vpop.f32.mrb[0].mxu0
    %428 = vmatprep.mubr.bf16.mxu0 0
    %429 = vmatmul.mubr.bf16.gmra.mrb[0].mxu0 %v197
    %v430 = vpop.f32.mrb[0].mxu0
    %v431 = vadd.f32 0.0, %v430
    %v432 = vpop.f32.mrb[0].mxu0
    %v433 = vpop.f32.mrb[0].mxu0
    %v434 = vadd.f32 0.0, %v433
    %v435 = vpop.f32.mrb[0].mxu0
    %436 = vmatprep.mubr.bf16.mxu0 0
    %437 = vmatmul.mubr.bf16.gmra.mrb[0].mxu0 %v200
    %v438 = vpop.f32.mrb[0].mxu0
    %v439 = vadd.f32 0.0, %v438
    %v440 = vpop.f32.mrb[0].mxu0
    %v441 = vpop.f32.mrb[0].mxu0
    %v442 = vadd.f32 0.0, %v441
    %v443 = vpop.f32.mrb[0].mxu0
    %444 = vmatprep.mubr.bf16.mxu0 0
    %445 = vmatmul.mubr.bf16.gmra.mrb[0].mxu0 %v203
    %v446 = vpop.f32.mrb[0].mxu0
    %v447 = vadd.f32 0.0, %v446
    %v448 = vpop.f32.mrb[0].mxu0
    %v449 = vpop.f32.mrb[0].mxu0
    %v450 = vadd.f32 0.0, %v449
    %v451 = vpop.f32.mrb[0].mxu0
    %452 = vmatprep.mubr.bf16.mxu0 0
    %453 = vmatmul.mubr.bf16.gmra.mrb[0].mxu0 %v206
    %v454 = vpop.f32.mrb[0].mxu0
    %v455 = vadd.f32 0.0, %v454
    %v456 = vpop.f32.mrb[0].mxu0
    %v457 = vpop.f32.mrb[0].mxu0
    %v458 = vadd.f32 0.0, %v457
    %v459 = vpop.f32.mrb[0].mxu0
    %460 = vmatprep.mubr.bf16.mxu0 0
    %461 = vmatmul.mubr.bf16.gmra.mrb[0].mxu0 %v209
    %v462 = vpop.f32.mrb[0].mxu0
    %v463 = vadd.f32 0.0, %v462
    %v464 = vpop.f32.mrb[0].mxu0
    %v465 = vpop.f32.mrb[0].mxu0
    %v466 = vadd.f32 0.0, %v465
    %v467 = vpop.f32.mrb[0].mxu0
    %468 = vmatprep.mubr.bf16.mxu0 0
    %469 = vmatmul.mubr.bf16.gmra.mrb[0].mxu0 %v212
    %v470 = vpop.f32.mrb[0].mxu0
    %v471 = vadd.f32 0.0, %v470
    %v472 = vpop.f32.mrb[0].mxu0
    %v473 = vpop.f32.mrb[0].mxu0
    %v474 = vadd.f32 0.0, %v473
    %v475 = vpop.f32.mrb[0].mxu0
    %476 = vmatprep.mubr.bf16.mxu0 0
    %477 = vmatmul.mubr.bf16.gmra.mrb[0].mxu0 %v215
    %v478 = vpop.f32.mrb[0].mxu0
    %v479 = vadd.f32 0.0, %v478
    %v480 = vpop.f32.mrb[0].mxu0
    %v481 = vpop.f32.mrb[0].mxu0
    %v482 = vadd.f32 0.0, %v481
    %v483 = vpop.f32.mrb[0].mxu0
    %484 = vmatprep.mubr.bf16.mxu0 0
    %485 = vmatmul.mubr.bf16.gmra.mrb[0].mxu0 %v218
    %v486 = vpop.f32.mrb[0].mxu0
    %v487 = vadd.f32 0.0, %v486
    %v488 = vpop.f32.mrb[0].mxu0
    %v489 = vpop.f32.mrb[0].mxu0
    %v490 = vadd.f32 0.0, %v489
    %v491 = vpop.f32.mrb[0].mxu0
    %492 = vmatprep.mubr.bf16.mxu0 0
    %493 = vmatmul.mubr.bf16.gmra.mrb[0].mxu0 %v221
    %v494 = vpop.f32.mrb[0].mxu0
    %v495 = vadd.f32 0.0, %v494
    %v496 = vpop.f32.mrb[0].mxu0
    %v497 = vpop.f32.mrb[0].mxu0
    %v498 = vadd.f32 0.0, %v497
    %v499 = vpop.f32.mrb[0].mxu0
    %500 = vmatprep.mubr.bf16.mxu0 0
    %501 = vmatmul.mubr.bf16.gmra.mrb[0].mxu0 %v224
    %v502 = vpop.f32.mrb[0].mxu0
    %v503 = vadd.f32 0.0, %v502
    %v504 = vpop.f32.mrb[0].mxu0
    %v505 = vpop.f32.mrb[0].mxu0
    %v506 = vadd.f32 0.0, %v505
    %v507 = vpop.f32.mrb[0].mxu0
    %508 = vmatprep.mubr.bf16.mxu0 0
    %509 = vmatmul.mubr.bf16.gmra.mrb[0].mxu0 %v227
    %v510 = vpop.f32.mrb[0].mxu0
    %v511 = vadd.f32 0.0, %v510
    %v512 = vpop.f32.mrb[0].mxu0
    %v513 = vpop.f32.mrb[0].mxu0
    %v514 = vadd.f32 0.0, %v513
    %v515 = vpop.f32.mrb[0].mxu0
    %516 = vmatprep.mubr.bf16.mxu0 0
    %517 = vmatmul.mubr.bf16.gmra.mrb[0].mxu0 %v230
    %v518 = vpop.f32.mrb[0].mxu0
    %v519 = vadd.f32 0.0, %v518
    %v520 = vpop.f32.mrb[0].mxu0
    %v521 = vpop.f32.mrb[0].mxu0
    %v522 = vadd.f32 0.0, %v521
    %v523 = vpop.f32.mrb[0].mxu0
    %524 = vdwg.mxu0
    %v525 = vlaneseq
    %v526 = vand.u32 %v525, 127
    %vm527 = vcmp.lt.s32.totalorder %v526, 32
    %v528 = vmax.f32 %v271, 0.0
    %v529 = vmax.f32 %v274, 0.0
    %v530 = vmax.f32 %v279, 0.0
    %v531 = vmax.f32 %v282, 0.0
    %v532 = vmax.f32 %v287, 0.0
    %v533 = vmax.f32 %v290, 0.0
    %v534 = vmax.f32 %v295, 0.0
    %v535 = vmax.f32 %v298, 0.0
    %v536 = vmax.f32 %v303, 0.0
    %v537 = vmax.f32 %v306, 0.0
    %v538 = vmax.f32 %v311, 0.0
    %v539 = vmax.f32 %v314, 0.0
    %v540 = vmax.f32 %v319, 0.0
    %v541 = vmax.f32 %v322, 0.0
    %v542 = vmax.f32 %v327, 0.0
    %v543 = vmax.f32 %v330, 0.0
    %v544 = vmax.f32 %v335, 0.0
    %v545 = vmax.f32 %v338, 0.0
    %v546 = vmax.f32 %v343, 0.0
    %v547 = vmax.f32 %v346, 0.0
    %v548 = vmax.f32 %v351, 0.0
    %v549 = vmax.f32 %v354, 0.0
    %v550 = vmax.f32 %v359, 0.0
    %v551 = vmax.f32 %v362, 0.0
    %v552 = vmax.f32 %v367, 0.0
    %v553 = vmax.f32 %v370, 0.0
    %v554 = vmax.f32 %v375, 0.0
    %v555 = vmax.f32 %v378, 0.0
    %v556 = vmax.f32 %v383, 0.0
    %v557 = vmax.f32 %v386, 0.0
    %v558 = vmax.f32 %v391, 0.0
    %v559 = vmax.f32 %v394, 0.0
    %v560 = vmax.f32 %v399, 0.0
    %v561 = vmax.f32 %v402, 0.0
    %v562 = vmax.f32 %v407, 0.0
    %v563 = vmax.f32 %v410, 0.0
    %v564 = vmax.f32 %v415, 0.0
    %v565 = vmax.f32 %v418, 0.0
    %v566 = vmax.f32 %v423, 0.0
    %v567 = vmax.f32 %v426, 0.0
    %v568 = vmax.f32 %v431, 0.0
    %v569 = vmax.f32 %v434, 0.0
    %v570 = vmax.f32 %v439, 0.0
    %v571 = vmax.f32 %v442, 0.0
    %v572 = vmax.f32 %v447, 0.0
    %v573 = vmax.f32 %v450, 0.0
    %v574 = vmax.f32 %v455, 0.0
    %v575 = vmax.f32 %v458, 0.0
    %v576 = vmax.f32 %v463, 0.0
    %v577 = vmax.f32 %v466, 0.0
    %v578 = vmax.f32 %v471, 0.0
    %v579 = vmax.f32 %v474, 0.0
    %v580 = vmax.f32 %v479, 0.0
    %v581 = vmax.f32 %v482, 0.0
    %v582 = vmax.f32 %v487, 0.0
    %v583 = vmax.f32 %v490, 0.0
    %v584 = vmax.f32 %v495, 0.0
    %v585 = vmax.f32 %v498, 0.0
    %v586 = vmax.f32 %v503, 0.0
    %v587 = vmax.f32 %v506, 0.0
    %v588 = vmax.f32 %v511, 0.0
    %v589 = vmax.f32 %v514, 0.0
    %v590 = vmax.f32 %v519, 0.0
    %v591 = vmax.f32 %v522, 0.0
    %v592 = vsel %vm527, %v528, %v271
    %v593 = vsel %vm527, %v529, %v274
    %v594 = vsel %vm527, %v530, %v279
    %v595 = vsel %vm527, %v531, %v282
    %v596 = vsel %vm527, %v532, %v287
    %v597 = vsel %vm527, %v533, %v290
    %v598 = vsel %vm527, %v534, %v295
    %v599 = vsel %vm527, %v535, %v298
    %v600 = vsel %vm527, %v536, %v303
    %v601 = vsel %vm527, %v537, %v306
    %v602 = vsel %vm527, %v538, %v311
    %v603 = vsel %vm527, %v539, %v314
    %v604 = vsel %vm527, %v540, %v319
    %v605 = vsel %vm527, %v541, %v322
    %v606 = vsel %vm527, %v542, %v327
    %v607 = vsel %vm527, %v543, %v330
    %v608 = vsel %vm527, %v544, %v335
    %v609 = vsel %vm527, %v545, %v338
    %v610 = vsel %vm527, %v546, %v343
    %v611 = vsel %vm527, %v547, %v346
    %v612 = vsel %vm527, %v548, %v351
    %v613 = vsel %vm527, %v549, %v354
    %v614 = vsel %vm527, %v550, %v359
    %v615 = vsel %vm527, %v551, %v362
    %v616 = vsel %vm527, %v552, %v367
    %v617 = vsel %vm527, %v553, %v370
    %v618 = vsel %vm527, %v554, %v375
    %v619 = vsel %vm527, %v555, %v378
    %v620 = vsel %vm527, %v556, %v383
    %v621 = vsel %vm527, %v557, %v386
    %v622 = vsel %vm527, %v558, %v391
    %v623 = vsel %vm527, %v559, %v394
    %v624 = vsel %vm527, %v560, %v399
    %v625 = vsel %vm527, %v561, %v402
    %v626 = vsel %vm527, %v562, %v407
    %v627 = vsel %vm527, %v563, %v410
    %v628 = vsel %vm527, %v564, %v415
    %v629 = vsel %vm527, %v565, %v418
    %v630 = vsel %vm527, %v566, %v423
    %v631 = vsel %vm527, %v567, %v426
    %v632 = vsel %vm527, %v568, %v431
    %v633 = vsel %vm527, %v569, %v434
    %v634 = vsel %vm527, %v570, %v439
    %v635 = vsel %vm527, %v571, %v442
    %v636 = vsel %vm527, %v572, %v447
    %v637 = vsel %vm527, %v573, %v450
    %v638 = vsel %vm527, %v574, %v455
    %v639 = vsel %vm527, %v575, %v458
    %v640 = vsel %vm527, %v576, %v463
    %v641 = vsel %vm527, %v577, %v466
    %v642 = vsel %vm527, %v578, %v471
    %v643 = vsel %vm527, %v579, %v474
    %v644 = vsel %vm527, %v580, %v479
    %v645 = vsel %vm527, %v581, %v482
    %v646 = vsel %vm527, %v582, %v487
    %v647 = vsel %vm527, %v583, %v490
    %v648 = vsel %vm527, %v584, %v495
    %v649 = vsel %vm527, %v585, %v498
    %v650 = vsel %vm527, %v586, %v503
    %v651 = vsel %vm527, %v587, %v506
    %v652 = vsel %vm527, %v588, %v511
    %v653 = vsel %vm527, %v589, %v514
    %v654 = vsel %vm527, %v590, %v519
    %v655 = vsel %vm527, %v591, %v522
    %v656 = vlaneseq
    %v657 = vshrl.u32 %v656, 7
    %v658 = vadd.s32 %v657, 8
    %v659 = vadd.s32 %v657, 16
    %v660 = vadd.s32 %v657, 24
    %v661 = vadd.s32 %v657, 32
    %v662 = vadd.s32 %v657, 40
    %v663 = vadd.s32 %v657, 48
    %v664 = vadd.s32 %v657, 56
    %v665 = vadd.s32 %v657, 64
    %v666 = vadd.s32 %v657, 72
    %v667 = vadd.s32 %v657, 80
    %v668 = vadd.s32 %v657, 88
    %v669 = vadd.s32 %v657, 96
    %v670 = vadd.s32 %v657, 104
    %v671 = vadd.s32 %v657, 112
    %v672 = vadd.s32 %v657, 120
    %v673 = vld [vmem:[%s0] sm:$0xf]
    %v674 = vlaneseq
    %v675 = vshrl.u32 %v674, 7
    %v676 = vsub.s32 0, %v675
    %v677 = vrot.slane %v673, %v676
    %v678 = vlaneseq
    %v679 = vshrl.u32 %v678, 7
    %v680 = vsub.s32 1, %v679
    %v681 = vrot.slane %v673, %v680
    %v682 = vlaneseq
    %v683 = vshrl.u32 %v682, 7
    %v684 = vsub.s32 2, %v683
    %v685 = vrot.slane %v673, %v684
    %v686 = vlaneseq
    %v687 = vshrl.u32 %v686, 7
    %v688 = vsub.s32 3, %v687
    %v689 = vrot.slane %v673, %v688
    %vm690 = vcmp.eq.s32.totalorder %v657, %v677
    %vm691 = vcmp.eq.s32.totalorder %v657, %v681
    %vm692 = vcmp.eq.s32.totalorder %v657, %v685
    %vm693 = vcmp.eq.s32.totalorder %v657, %v689
    %vm694 = vcmp.eq.s32.totalorder %v658, %v677
    %vm695 = vcmp.eq.s32.totalorder %v658, %v681
    %vm696 = vcmp.eq.s32.totalorder %v658, %v685
    %vm697 = vcmp.eq.s32.totalorder %v658, %v689
    %vm698 = vcmp.eq.s32.totalorder %v659, %v677
    %vm699 = vcmp.eq.s32.totalorder %v659, %v681
    %vm700 = vcmp.eq.s32.totalorder %v659, %v685
    %vm701 = vcmp.eq.s32.totalorder %v659, %v689
    %vm702 = vcmp.eq.s32.totalorder %v660, %v677
    %vm703 = vcmp.eq.s32.totalorder %v660, %v681
    %vm704 = vcmp.eq.s32.totalorder %v660, %v685
    %vm705 = vcmp.eq.s32.totalorder %v660, %v689
    %vm706 = vcmp.eq.s32.totalorder %v661, %v677
    %vm707 = vcmp.eq.s32.totalorder %v661, %v681
    %vm708 = vcmp.eq.s32.totalorder %v661, %v685
    %vm709 = vcmp.eq.s32.totalorder %v661, %v689
    %vm710 = vcmp.eq.s32.totalorder %v662, %v677
    %vm711 = vcmp.eq.s32.totalorder %v662, %v681
    %vm712 = vcmp.eq.s32.totalorder %v662, %v685
    %vm713 = vcmp.eq.s32.totalorder %v662, %v689
    %vm714 = vcmp.eq.s32.totalorder %v663, %v677
    %vm715 = vcmp.eq.s32.totalorder %v663, %v681
    %vm716 = vcmp.eq.s32.totalorder %v663, %v685
    %vm717 = vcmp.eq.s32.totalorder %v663, %v689
    %vm718 = vcmp.eq.s32.totalorder %v664, %v677
    %vm719 = vcmp.eq.s32.totalorder %v664, %v681
    %vm720 = vcmp.eq.s32.totalorder %v664, %v685
    %vm721 = vcmp.eq.s32.totalorder %v664, %v689
    %vm722 = vcmp.eq.s32.totalorder %v665, %v677
    %vm723 = vcmp.eq.s32.totalorder %v665, %v681
    %vm724 = vcmp.eq.s32.totalorder %v665, %v685
    %vm725 = vcmp.eq.s32.totalorder %v665, %v689
    %vm726 = vcmp.eq.s32.totalorder %v666, %v677
    %vm727 = vcmp.eq.s32.totalorder %v666, %v681
    %vm728 = vcmp.eq.s32.totalorder %v666, %v685
    %vm729 = vcmp.eq.s32.totalorder %v666, %v689
    %vm730 = vcmp.eq.s32.totalorder %v667, %v677
    %vm731 = vcmp.eq.s32.totalorder %v667, %v681
    %vm732 = vcmp.eq.s32.totalorder %v667, %v685
    %vm733 = vcmp.eq.s32.totalorder %v667, %v689
    %vm734 = vcmp.eq.s32.totalorder %v668, %v677
    %vm735 = vcmp.eq.s32.totalorder %v668, %v681
    %vm736 = vcmp.eq.s32.totalorder %v668, %v685
    %vm737 = vcmp.eq.s32.totalorder %v668, %v689
    %vm738 = vcmp.eq.s32.totalorder %v669, %v677
    %vm739 = vcmp.eq.s32.totalorder %v669, %v681
    %vm740 = vcmp.eq.s32.totalorder %v669, %v685
    %vm741 = vcmp.eq.s32.totalorder %v669, %v689
    %vm742 = vcmp.eq.s32.totalorder %v670, %v677
    %vm743 = vcmp.eq.s32.totalorder %v670, %v681
    %vm744 = vcmp.eq.s32.totalorder %v670, %v685
    %vm745 = vcmp.eq.s32.totalorder %v670, %v689
    %vm746 = vcmp.eq.s32.totalorder %v671, %v677
    %vm747 = vcmp.eq.s32.totalorder %v671, %v681
    %vm748 = vcmp.eq.s32.totalorder %v671, %v685
    %vm749 = vcmp.eq.s32.totalorder %v671, %v689
    %vm750 = vcmp.eq.s32.totalorder %v672, %v677
    %vm751 = vcmp.eq.s32.totalorder %v672, %v681
    %vm752 = vcmp.eq.s32.totalorder %v672, %v685
    %vm753 = vcmp.eq.s32.totalorder %v672, %v689
    %v754 = vsel %vm690, 1, 0
    %v755 = vsel %vm691, 1, 0
    %v756 = vsel %vm692, 1, 0
    %v757 = vsel %vm693, 1, 0
    %v758 = vsel %vm694, 1, 0
    %v759 = vsel %vm695, 1, 0
    %v760 = vsel %vm696, 1, 0
    %v761 = vsel %vm697, 1, 0
    %v762 = vsel %vm698, 1, 0
    %v763 = vsel %vm699, 1, 0
    %v764 = vsel %vm700, 1, 0
    %v765 = vsel %vm701, 1, 0
    %v766 = vsel %vm702, 1, 0
    %v767 = vsel %vm703, 1, 0
    %v768 = vsel %vm704, 1, 0
    %v769 = vsel %vm705, 1, 0
    %v770 = vsel %vm706, 1, 0
    %v771 = vsel %vm707, 1, 0
    %v772 = vsel %vm708, 1, 0
    %v773 = vsel %vm709, 1, 0
    %v774 = vsel %vm710, 1, 0
    %v775 = vsel %vm711, 1, 0
    %v776 = vsel %vm712, 1, 0
    %v777 = vsel %vm713, 1, 0
    %v778 = vsel %vm714, 1, 0
    %v779 = vsel %vm715, 1, 0
    %v780 = vsel %vm716, 1, 0
    %v781 = vsel %vm717, 1, 0
    %v782 = vsel %vm718, 1, 0
    %v783 = vsel %vm719, 1, 0
    %v784 = vsel %vm720, 1, 0
    %v785 = vsel %vm721, 1, 0
    %v786 = vsel %vm722, 1, 0
    %v787 = vsel %vm723, 1, 0
    %v788 = vsel %vm724, 1, 0
    %v789 = vsel %vm725, 1, 0
    %v790 = vsel %vm726, 1, 0
    %v791 = vsel %vm727, 1, 0
    %v792 = vsel %vm728, 1, 0
    %v793 = vsel %vm729, 1, 0
    %v794 = vsel %vm730, 1, 0
    %v795 = vsel %vm731, 1, 0
    %v796 = vsel %vm732, 1, 0
    %v797 = vsel %vm733, 1, 0
    %v798 = vsel %vm734, 1, 0
    %v799 = vsel %vm735, 1, 0
    %v800 = vsel %vm736, 1, 0
    %v801 = vsel %vm737, 1, 0
    %v802 = vsel %vm738, 1, 0
    %v803 = vsel %vm739, 1, 0
    %v804 = vsel %vm740, 1, 0
    %v805 = vsel %vm741, 1, 0
    %v806 = vsel %vm742, 1, 0
    %v807 = vsel %vm743, 1, 0
    %v808 = vsel %vm744, 1, 0
    %v809 = vsel %vm745, 1, 0
    %v810 = vsel %vm746, 1, 0
    %v811 = vsel %vm747, 1, 0
    %v812 = vsel %vm748, 1, 0
    %v813 = vsel %vm749, 1, 0
    %v814 = vsel %vm750, 1, 0
    %v815 = vsel %vm751, 1, 0
    %v816 = vsel %vm752, 1, 0
    %v817 = vsel %vm753, 1, 0
    %v818 = vcvt.s32.f32 %v754
    %v819 = vcvt.s32.f32 %v755
    %v820 = vcvt.s32.f32 %v756
    %v821 = vcvt.s32.f32 %v757
    %v822 = vcvt.s32.f32 %v758
    %v823 = vcvt.s32.f32 %v759
    %v824 = vcvt.s32.f32 %v760
    %v825 = vcvt.s32.f32 %v761
    %v826 = vcvt.s32.f32 %v762
    %v827 = vcvt.s32.f32 %v763
    %v828 = vcvt.s32.f32 %v764
    %v829 = vcvt.s32.f32 %v765
    %v830 = vcvt.s32.f32 %v766
    %v831 = vcvt.s32.f32 %v767
    %v832 = vcvt.s32.f32 %v768
    %v833 = vcvt.s32.f32 %v769
    %v834 = vcvt.s32.f32 %v770
    %v835 = vcvt.s32.f32 %v771
    %v836 = vcvt.s32.f32 %v772
    %v837 = vcvt.s32.f32 %v773
    %v838 = vcvt.s32.f32 %v774
    %v839 = vcvt.s32.f32 %v775
    %v840 = vcvt.s32.f32 %v776
    %v841 = vcvt.s32.f32 %v777
    %v842 = vcvt.s32.f32 %v778
    %v843 = vcvt.s32.f32 %v779
    %v844 = vcvt.s32.f32 %v780
    %v845 = vcvt.s32.f32 %v781
    %v846 = vcvt.s32.f32 %v782
    %v847 = vcvt.s32.f32 %v783
    %v848 = vcvt.s32.f32 %v784
    %v849 = vcvt.s32.f32 %v785
    %v850 = vcvt.s32.f32 %v786
    %v851 = vcvt.s32.f32 %v787
    %v852 = vcvt.s32.f32 %v788
    %v853 = vcvt.s32.f32 %v789
    %v854 = vcvt.s32.f32 %v790
    %v855 = vcvt.s32.f32 %v791
    %v856 = vcvt.s32.f32 %v792
    %v857 = vcvt.s32.f32 %v793
    %v858 = vcvt.s32.f32 %v794
    %v859 = vcvt.s32.f32 %v795
    %v860 = vcvt.s32.f32 %v796
    %v861 = vcvt.s32.f32 %v797
    %v862 = vcvt.s32.f32 %v798
    %v863 = vcvt.s32.f32 %v799
    %v864 = vcvt.s32.f32 %v800
    %v865 = vcvt.s32.f32 %v801
    %v866 = vcvt.s32.f32 %v802
    %v867 = vcvt.s32.f32 %v803
    %v868 = vcvt.s32.f32 %v804
    %v869 = vcvt.s32.f32 %v805
    %v870 = vcvt.s32.f32 %v806
    %v871 = vcvt.s32.f32 %v807
    %v872 = vcvt.s32.f32 %v808
    %v873 = vcvt.s32.f32 %v809
    %v874 = vcvt.s32.f32 %v810
    %v875 = vcvt.s32.f32 %v811
    %v876 = vcvt.s32.f32 %v812
    %v877 = vcvt.s32.f32 %v813
    %v878 = vcvt.s32.f32 %v814
    %v879 = vcvt.s32.f32 %v815
    %v880 = vcvt.s32.f32 %v816
    %v881 = vcvt.s32.f32 %v817
    %v882 = vpack.c.bf16 %v822, %v818
    %v883 = vpack.c.bf16 %v823, %v819
    %v884 = vpack.c.bf16 %v824, %v820
    %v885 = vpack.c.bf16 %v825, %v821
    %v886 = vpack.c.bf16 %v830, %v826
    %v887 = vpack.c.bf16 %v831, %v827
    %v888 = vpack.c.bf16 %v832, %v828
    %v889 = vpack.c.bf16 %v833, %v829
    %v890 = vpack.c.bf16 %v838, %v834
    %v891 = vpack.c.bf16 %v839, %v835
    %v892 = vpack.c.bf16 %v840, %v836
    %v893 = vpack.c.bf16 %v841, %v837
    %v894 = vpack.c.bf16 %v846, %v842
    %v895 = vpack.c.bf16 %v847, %v843
    %v896 = vpack.c.bf16 %v848, %v844
    %v897 = vpack.c.bf16 %v849, %v845
    %v898 = vpack.c.bf16 %v854, %v850
    %v899 = vpack.c.bf16 %v855, %v851
    %v900 = vpack.c.bf16 %v856, %v852
    %v901 = vpack.c.bf16 %v857, %v853
    %v902 = vpack.c.bf16 %v862, %v858
    %v903 = vpack.c.bf16 %v863, %v859
    %v904 = vpack.c.bf16 %v864, %v860
    %v905 = vpack.c.bf16 %v865, %v861
    %v906 = vpack.c.bf16 %v870, %v866
    %v907 = vpack.c.bf16 %v871, %v867
    %v908 = vpack.c.bf16 %v872, %v868
    %v909 = vpack.c.bf16 %v873, %v869
    %v910 = vpack.c.bf16 %v878, %v874
    %v911 = vpack.c.bf16 %v879, %v875
    %v912 = vpack.c.bf16 %v880, %v876
    %v913 = vpack.c.bf16 %v881, %v877
    %v914 = vld [vmem:[#allocation2] sm:$0xff]
    %v915 = vld [vmem:[#allocation2 + $0x8] sm:$0xff]
    %v916 = vld [vmem:[#allocation2 + $0x10] sm:$0xff]
    %v917 = vld [vmem:[#allocation2 + $0x18] sm:$0xff]
    %v918 = vld [vmem:[#allocation2 + $0x20] sm:$0xff]
    %v919 = vld [vmem:[#allocation2 + $0x28] sm:$0xff]
    %v920 = vld [vmem:[#allocation2 + $0x30] sm:$0xff]
    %v921 = vld [vmem:[#allocation2 + $0x38] sm:$0xff]
    %v922 = vld [vmem:[#allocation2 + $0x40] sm:$0xff]
    %v923 = vld [vmem:[#allocation2 + $0x48] sm:$0xff]
    %v924 = vld [vmem:[#allocation2 + $0x50] sm:$0xff]
    %v925 = vld [vmem:[#allocation2 + $0x58] sm:$0xff]
    %v926 = vld [vmem:[#allocation2 + $0x60] sm:$0xff]
    %v927 = vld [vmem:[#allocation2 + $0x68] sm:$0xff]
    %v928 = vld [vmem:[#allocation2 + $0x70] sm:$0xff]
    %v929 = vld [vmem:[#allocation2 + $0x78] sm:$0xff]
    %v930 = vpack.c.bf16 %v593, %v592
    %v931 = vpack.c.bf16 %v595, %v594
    %v932 = vpack.c.bf16 %v597, %v596
    %v933 = vpack.c.bf16 %v599, %v598
    %v934 = vpack.c.bf16 %v601, %v600
    %v935 = vpack.c.bf16 %v603, %v602
    %v936 = vpack.c.bf16 %v605, %v604
    %v937 = vpack.c.bf16 %v607, %v606
    %v938 = vpack.c.bf16 %v609, %v608
    %v939 = vpack.c.bf16 %v611, %v610
    %v940 = vpack.c.bf16 %v613, %v612
    %v941 = vpack.c.bf16 %v615, %v614
    %v942 = vpack.c.bf16 %v617, %v616
    %v943 = vpack.c.bf16 %v619, %v618
    %v944 = vpack.c.bf16 %v621, %v620
    %v945 = vpack.c.bf16 %v623, %v622
    %v946 = vpack.c.bf16 %v625, %v624
    %v947 = vpack.c.bf16 %v627, %v626
    %v948 = vpack.c.bf16 %v629, %v628
    %v949 = vpack.c.bf16 %v631, %v630
    %v950 = vpack.c.bf16 %v633, %v632
    %v951 = vpack.c.bf16 %v635, %v634
    %v952 = vpack.c.bf16 %v637, %v636
    %v953 = vpack.c.bf16 %v639, %v638
    %v954 = vpack.c.bf16 %v641, %v640
    %v955 = vpack.c.bf16 %v643, %v642
    %v956 = vpack.c.bf16 %v645, %v644
    %v957 = vpack.c.bf16 %v647, %v646
    %v958 = vpack.c.bf16 %v649, %v648
    %v959 = vpack.c.bf16 %v651, %v650
    %v960 = vpack.c.bf16 %v653, %v652
    %v961 = vpack.c.bf16 %v655, %v654
    %962 = vmatprep.subr.bf16.mxu0 0
    %963 = vmatpush1.bf16.msra.mxu0 %v930
    %964 = vmatprep.subr.bf16.mxu0 0
    %965 = vmatpush1.bf16.msra.mxu0 %v931
    %966 = vmatprep.subr.bf16.mxu0 0
    %967 = vmatpush1.bf16.msra.mxu0 %v932
    %968 = vmatprep.subr.bf16.mxu0 0
    %969 = vmatpush1.bf16.msra.mxu0 %v933
    %970 = vmatprep.subr.bf16.mxu0 0
    %971 = vmatpush1.bf16.msra.mxu0 %v934
    %972 = vmatprep.subr.bf16.mxu0 0
    %973 = vmatpush1.bf16.msra.mxu0 %v935
    %974 = vmatprep.subr.bf16.mxu0 0
    %975 = vmatpush1.bf16.msra.mxu0 %v936
    %976 = vmatprep.subr.bf16.mxu0 0
    %977 = vmatpush1.bf16.msra.mxu0 %v937
    %978 = vmatprep.subr.bf16.mxu0 0
    %979 = vmatpush1.bf16.msra.mxu0 %v938
    %980 = vmatprep.subr.bf16.mxu0 0
    %981 = vmatpush1.bf16.msra.mxu0 %v939
    %982 = vmatprep.subr.bf16.mxu0 0
    %983 = vmatpush1.bf16.msra.mxu0 %v940
    %984 = vmatprep.subr.bf16.mxu0 0
    %985 = vmatpush1.bf16.msra.mxu0 %v941
    %986 = vmatprep.subr.bf16.mxu0 0
    %987 = vmatpush1.bf16.msra.mxu0 %v942
    %988 = vmatprep.subr.bf16.mxu0 0
    %989 = vmatpush1.bf16.msra.mxu0 %v943
    %990 = vmatprep.subr.bf16.mxu0 0
    %991 = vmatpush1.bf16.msra.mxu0 %v944
    %992 = vmatprep.subr.bf16.mxu0 0
    %993 = vmatpush1.bf16.msra.mxu0 %v945
    %994 = vmatprep.mubr.bf16.mxu0 %v883
    %995 = vmatmul.mubr.bf16.gmra.mrb[0].mxu0 %v882
    %v996 = vpop.f32.mrb[0].mxu0
    %v997 = vadd.f32 0.0, %v996
    %v998 = vpop.f32.mrb[0].mxu0
    %v999 = vpop.f32.mrb[0].mxu0
    %v1000 = vadd.f32 0.0, %v999
    %v1001 = vpop.f32.mrb[0].mxu0
    %1002 = vmatprep.mubr.bf16.mxu0 %v887
    %1003 = vmatmul.mubr.bf16.gmra.mrb[0].mxu0 %v886
    %v1004 = vpop.f32.mrb[0].mxu0
    %v1005 = vadd.f32 0.0, %v1004
    %v1006 = vpop.f32.mrb[0].mxu0
    %v1007 = vpop.f32.mrb[0].mxu0
    %v1008 = vadd.f32 0.0, %v1007
    %v1009 = vpop.f32.mrb[0].mxu0
    %1010 = vmatprep.mubr.bf16.mxu0 %v891
    %1011 = vmatmul.mubr.bf16.gmra.mrb[0].mxu0 %v890
    %v1012 = vpop.f32.mrb[0].mxu0
    %v1013 = vadd.f32 0.0, %v1012
    %v1014 = vpop.f32.mrb[0].mxu0
    %v1015 = vpop.f32.mrb[0].mxu0
    %v1016 = vadd.f32 0.0, %v1015
    %v1017 = vpop.f32.mrb[0].mxu0
    %1018 = vmatprep.mubr.bf16.mxu0 %v895
    %1019 = vmatmul.mubr.bf16.gmra.mrb[0].mxu0 %v894
    %v1020 = vpop.f32.mrb[0].mxu0
    %v1021 = vadd.f32 0.0, %v1020
    %v1022 = vpop.f32.mrb[0].mxu0
    %v1023 = vpop.f32.mrb[0].mxu0
    %v1024 = vadd.f32 0.0, %v1023
    %v1025 = vpop.f32.mrb[0].mxu0
    %1026 = vmatprep.mubr.bf16.mxu0 %v899
    %1027 = vmatmul.mubr.bf16.gmra.mrb[0].mxu0 %v898
    %v1028 = vpop.f32.mrb[0].mxu0
    %v1029 = vadd.f32 0.0, %v1028
    %v1030 = vpop.f32.mrb[0].mxu0
    %v1031 = vpop.f32.mrb[0].mxu0
    %v1032 = vadd.f32 0.0, %v1031
    %v1033 = vpop.f32.mrb[0].mxu0
    %1034 = vmatprep.mubr.bf16.mxu0 %v903
    %1035 = vmatmul.mubr.bf16.gmra.mrb[0].mxu0 %v902
    %v1036 = vpop.f32.mrb[0].mxu0
    %v1037 = vadd.f32 0.0, %v1036
    %v1038 = vpop.f32.mrb[0].mxu0
    %v1039 = vpop.f32.mrb[0].mxu0
    %v1040 = vadd.f32 0.0, %v1039
    %v1041 = vpop.f32.mrb[0].mxu0
    %1042 = vmatprep.mubr.bf16.mxu0 %v907
    %1043 = vmatmul.mubr.bf16.gmra.mrb[0].mxu0 %v906
    %v1044 = vpop.f32.mrb[0].mxu0
    %v1045 = vadd.f32 0.0, %v1044
    %v1046 = vpop.f32.mrb[0].mxu0
    %v1047 = vpop.f32.mrb[0].mxu0
    %v1048 = vadd.f32 0.0, %v1047
    %v1049 = vpop.f32.mrb[0].mxu0
    %1050 = vmatprep.mubr.bf16.mxu0 %v911
    %1051 = vmatmul.mubr.bf16.gmra.mrb[0].mxu0 %v910
    %v1052 = vpop.f32.mrb[0].mxu0
    %v1053 = vadd.f32 0.0, %v1052
    %v1054 = vpop.f32.mrb[0].mxu0
    %v1055 = vpop.f32.mrb[0].mxu0
    %v1056 = vadd.f32 0.0, %v1055
    %v1057 = vpop.f32.mrb[0].mxu0
    %1058 = vdwg.mxu0
    %1059 = vmatprep.subr.bf16.mxu0 0
    %1060 = vmatpush1.bf16.msra.mxu0 %v946
    %1061 = vmatprep.subr.bf16.mxu0 0
    %1062 = vmatpush1.bf16.msra.mxu0 %v947
    %1063 = vmatprep.subr.bf16.mxu0 0
    %1064 = vmatpush1.bf16.msra.mxu0 %v948
    %1065 = vmatprep.subr.bf16.mxu0 0
    %1066 = vmatpush1.bf16.msra.mxu0 %v949
    %1067 = vmatprep.subr.bf16.mxu0 0
    %1068 = vmatpush1.bf16.msra.mxu0 %v950
    %1069 = vmatprep.subr.bf16.mxu0 0
    %1070 = vmatpush1.bf16.msra.mxu0 %v951
    %1071 = vmatprep.subr.bf16.mxu0 0
    %1072 = vmatpush1.bf16.msra.mxu0 %v952
    %1073 = vmatprep.subr.bf16.mxu0 0
    %1074 = vmatpush1.bf16.msra.mxu0 %v953
    %1075 = vmatprep.subr.bf16.mxu0 0
    %1076 = vmatpush1.bf16.msra.mxu0 %v954
    %1077 = vmatprep.subr.bf16.mxu0 0
    %1078 = vmatpush1.bf16.msra.mxu0 %v955
    %1079 = vmatprep.subr.bf16.mxu0 0
    %1080 = vmatpush1.bf16.msra.mxu0 %v956
    %1081 = vmatprep.subr.bf16.mxu0 0
    %1082 = vmatpush1.bf16.msra.mxu0 %v957
    %1083 = vmatprep.subr.bf16.mxu0 0
    %1084 = vmatpush1.bf16.msra.mxu0 %v958
    %1085 = vmatprep.subr.bf16.mxu0 0
    %1086 = vmatpush1.bf16.msra.mxu0 %v959
    %1087 = vmatprep.subr.bf16.mxu0 0
    %1088 = vmatpush1.bf16.msra.mxu0 %v960
    %1089 = vmatprep.subr.bf16.mxu0 0
    %1090 = vmatpush1.bf16.msra.mxu0 %v961
    %1091 = vmatprep.mubr.bf16.mxu0 %v885
    %1092 = vmatmul.mubr.bf16.gmra.mrb[0].mxu0 %v884
    %v1093 = vpop.f32.mrb[0].mxu0
    %v1094 = vadd.f32 %v997, %v1093
    %v1095 = vpop.f32.mrb[0].mxu0
    %v1096 = vpop.f32.mrb[0].mxu0
    %v1097 = vadd.f32 %v1000, %v1096
    %v1098 = vpop.f32.mrb[0].mxu0
    %1099 = vmatprep.mubr.bf16.mxu0 %v889
    %1100 = vmatmul.mubr.bf16.gmra.mrb[0].mxu0 %v888
    %v1101 = vpop.f32.mrb[0].mxu0
    %v1102 = vadd.f32 %v1005, %v1101
    %v1103 = vpop.f32.mrb[0].mxu0
    %v1104 = vpop.f32.mrb[0].mxu0
    %v1105 = vadd.f32 %v1008, %v1104
    %v1106 = vpop.f32.mrb[0].mxu0
    %1107 = vmatprep.mubr.bf16.mxu0 %v893
    %1108 = vmatmul.mubr.bf16.gmra.mrb[0].mxu0 %v892
    %v1109 = vpop.f32.mrb[0].mxu0
    %v1110 = vadd.f32 %v1013, %v1109
    %v1111 = vpop.f32.mrb[0].mxu0
    %v1112 = vpop.f32.mrb[0].mxu0
    %v1113 = vadd.f32 %v1016, %v1112
    %v1114 = vpop.f32.mrb[0].mxu0
    %1115 = vmatprep.mubr.bf16.mxu0 %v897
    %1116 = vmatmul.mubr.bf16.gmra.mrb[0].mxu0 %v896
    %v1117 = vpop.f32.mrb[0].mxu0
    %v1118 = vadd.f32 %v1021, %v1117
    %v1119 = vpop.f32.mrb[0].mxu0
    %v1120 = vpop.f32.mrb[0].mxu0
    %v1121 = vadd.f32 %v1024, %v1120
    %v1122 = vpop.f32.mrb[0].mxu0
    %1123 = vmatprep.mubr.bf16.mxu0 %v901
    %1124 = vmatmul.mubr.bf16.gmra.mrb[0].mxu0 %v900
    %v1125 = vpop.f32.mrb[0].mxu0
    %v1126 = vadd.f32 %v1029, %v1125
    %v1127 = vpop.f32.mrb[0].mxu0
    %v1128 = vpop.f32.mrb[0].mxu0
    %v1129 = vadd.f32 %v1032, %v1128
    %v1130 = vpop.f32.mrb[0].mxu0
    %1131 = vmatprep.mubr.bf16.mxu0 %v905
    %1132 = vmatmul.mubr.bf16.gmra.mrb[0].mxu0 %v904
    %v1133 = vpop.f32.mrb[0].mxu0
    %v1134 = vadd.f32 %v1037, %v1133
    %v1135 = vpop.f32.mrb[0].mxu0
    %v1136 = vpop.f32.mrb[0].mxu0
    %v1137 = vadd.f32 %v1040, %v1136
    %v1138 = vpop.f32.mrb[0].mxu0
    %1139 = vmatprep.mubr.bf16.mxu0 %v909
    %1140 = vmatmul.mubr.bf16.gmra.mrb[0].mxu0 %v908
    %v1141 = vpop.f32.mrb[0].mxu0
    %v1142 = vadd.f32 %v1045, %v1141
    %v1143 = vpop.f32.mrb[0].mxu0
    %v1144 = vpop.f32.mrb[0].mxu0
    %v1145 = vadd.f32 %v1048, %v1144
    %v1146 = vpop.f32.mrb[0].mxu0
    %1147 = vmatprep.mubr.bf16.mxu0 %v913
    %1148 = vmatmul.mubr.bf16.gmra.mrb[0].mxu0 %v912
    %v1149 = vpop.f32.mrb[0].mxu0
    %v1150 = vadd.f32 %v1053, %v1149
    %v1151 = vpop.f32.mrb[0].mxu0
    %v1152 = vpop.f32.mrb[0].mxu0
    %v1153 = vadd.f32 %v1056, %v1152
    %v1154 = vpop.f32.mrb[0].mxu0
    %1155 = vdwg.mxu0
    %v1156 = vadd.f32 %v914, %v1094
    %v1157 = vadd.f32 %v915, %v1097
    %v1158 = vadd.f32 %v916, %v1102
    %v1159 = vadd.f32 %v917, %v1105
    %v1160 = vadd.f32 %v918, %v1110
    %v1161 = vadd.f32 %v919, %v1113
    %v1162 = vadd.f32 %v920, %v1118
    %v1163 = vadd.f32 %v921, %v1121
    %v1164 = vadd.f32 %v922, %v1126
    %v1165 = vadd.f32 %v923, %v1129
    %v1166 = vadd.f32 %v924, %v1134
    %v1167 = vadd.f32 %v925, %v1137
    %v1168 = vadd.f32 %v926, %v1142
    %v1169 = vadd.f32 %v927, %v1145
    %v1170 = vadd.f32 %v928, %v1150
    %v1171 = vadd.f32 %v929, %v1153
    %1172 = vst [vmem:[#allocation2] sm:$0xff] %v1156
    %1173 = vst [vmem:[#allocation2 + $0x8] sm:$0xff] %v1157
    %1174 = vst [vmem:[#allocation2 + $0x10] sm:$0xff] %v1158
    %1175 = vst [vmem:[#allocation2 + $0x18] sm:$0xff] %v1159
    %1176 = vst [vmem:[#allocation2 + $0x20] sm:$0xff] %v1160
    %1177 = vst [vmem:[#allocation2 + $0x28] sm:$0xff] %v1161
    %1178 = vst [vmem:[#allocation2 + $0x30] sm:$0xff] %v1162
    %1179 = vst [vmem:[#allocation2 + $0x38] sm:$0xff] %v1163
    %1180 = vst [vmem:[#allocation2 + $0x40] sm:$0xff] %v1164
    %1181 = vst [vmem:[#allocation2 + $0x48] sm:$0xff] %v1165
    %1182 = vst [vmem:[#allocation2 + $0x50] sm:$0xff] %v1166
    %1183 = vst [vmem:[#allocation2 + $0x58] sm:$0xff] %v1167
    %1184 = vst [vmem:[#allocation2 + $0x60] sm:$0xff] %v1168
    %1185 = vst [vmem:[#allocation2 + $0x68] sm:$0xff] %v1169
    %1186 = vst [vmem:[#allocation2 + $0x70] sm:$0xff] %v1170
    %1187 = vst [vmem:[#allocation2 + $0x78] sm:$0xff] %v1171
    // Predicated region
    $region18: #{tpu_custom_call.1} parent=1 // pred_check
      %p1188 = pneg %p16
    $region19: #{tpu_custom_call.1} parent=1 // pred_check_branch
      %1190 = sbr.rel (%p1188) target = $region21
    $region20: #{tpu_custom_call.1} parent=1 // pred_region
      %v1191 = vld [vmem:[#allocation2] sm:$0xff]
      %v1192 = vld [vmem:[#allocation2 + $0x8] sm:$0xff]
      %v1193 = vld [vmem:[#allocation2 + $0x10] sm:$0xff]
      %v1194 = vld [vmem:[#allocation2 + $0x18] sm:$0xff]
      %v1195 = vld [vmem:[#allocation2 + $0x20] sm:$0xff]
      %v1196 = vld [vmem:[#allocation2 + $0x28] sm:$0xff]
      %v1197 = vld [vmem:[#allocation2 + $0x30] sm:$0xff]
      %v1198 = vld [vmem:[#allocation2 + $0x38] sm:$0xff]
      %v1199 = vld [vmem:[#allocation2 + $0x40] sm:$0xff]
      %v1200 = vld [vmem:[#allocation2 + $0x48] sm:$0xff]
      %v1201 = vld [vmem:[#allocation2 + $0x50] sm:$0xff]
      %v1202 = vld [vmem:[#allocation2 + $0x58] sm:$0xff]
      %v1203 = vld [vmem:[#allocation2 + $0x60] sm:$0xff]
      %v1204 = vld [vmem:[#allocation2 + $0x68] sm:$0xff]
      %v1205 = vld [vmem:[#allocation2 + $0x70] sm:$0xff]
      %v1206 = vld [vmem:[#allocation2 + $0x78] sm:$0xff]
      %v1207 = vmax.f32 %v1191, 1.0
      %v1208 = vmax.f32 %v1192, 1.0
      %v1209 = vmax.f32 %v1193, 1.0
      %v1210 = vmax.f32 %v1194, 1.0
      %v1211 = vmax.f32 %v1195, 1.0
      %v1212 = vmax.f32 %v1196, 1.0
      %v1213 = vmax.f32 %v1197, 1.0
      %v1214 = vmax.f32 %v1198, 1.0
      %v1215 = vmax.f32 %v1199, 1.0
      %v1216 = vmax.f32 %v1200, 1.0
      %v1217 = vmax.f32 %v1201, 1.0
      %v1218 = vmax.f32 %v1202, 1.0
      %v1219 = vmax.f32 %v1203, 1.0
      %v1220 = vmax.f32 %v1204, 1.0
      %v1221 = vmax.f32 %v1205, 1.0
      %v1222 = vmax.f32 %v1206, 1.0
      %1224 = vset.pattern.permute.xlu0 35
      %1225 = vperm.xlu0 %1224, %v1207
      %v1226 = vpop.permute.xlu0 %1225
      %1229 = vset.pattern.permute.xlu0 35
      %1230 = vperm.xlu0 %1229, %v1208
      %v1231 = vpop.permute.xlu0 %1230
      %1234 = vset.pattern.permute.xlu0 35
      %1235 = vperm.xlu0 %1234, %v1209
      %v1236 = vpop.permute.xlu0 %1235
      %1239 = vset.pattern.permute.xlu0 35
      %1240 = vperm.xlu0 %1239, %v1210
      %v1241 = vpop.permute.xlu0 %1240
      %1244 = vset.pattern.permute.xlu0 35
      %1245 = vperm.xlu0 %1244, %v1211
      %v1246 = vpop.permute.xlu0 %1245
      %1249 = vset.pattern.permute.xlu0 35
      %1250 = vperm.xlu0 %1249, %v1212
      %v1251 = vpop.permute.xlu0 %1250
      %1254 = vset.pattern.permute.xlu0 35
      %1255 = vperm.xlu0 %1254, %v1213
      %v1256 = vpop.permute.xlu0 %1255
      %1259 = vset.pattern.permute.xlu0 35
      %1260 = vperm.xlu0 %1259, %v1214
      %v1261 = vpop.permute.xlu0 %1260
      %1264 = vset.pattern.permute.xlu0 35
      %1265 = vperm.xlu0 %1264, %v1215
      %v1266 = vpop.permute.xlu0 %1265
      %1269 = vset.pattern.permute.xlu0 35
      %1270 = vperm.xlu0 %1269, %v1216
      %v1271 = vpop.permute.xlu0 %1270
      %1274 = vset.pattern.permute.xlu0 35
      %1275 = vperm.xlu0 %1274, %v1217
      %v1276 = vpop.permute.xlu0 %1275
      %1279 = vset.pattern.permute.xlu0 35
      %1280 = vperm.xlu0 %1279, %v1218
      %v1281 = vpop.permute.xlu0 %1280
      %1284 = vset.pattern.permute.xlu0 35
      %1285 = vperm.xlu0 %1284, %v1219
      %v1286 = vpop.permute.xlu0 %1285
      %1289 = vset.pattern.permute.xlu0 35
      %1290 = vperm.xlu0 %1289, %v1220
      %v1291 = vpop.permute.xlu0 %1290
      %1294 = vset.pattern.permute.xlu0 35
      %1295 = vperm.xlu0 %1294, %v1221
      %v1296 = vpop.permute.xlu0 %1295
      %1299 = vset.pattern.permute.xlu0 35
      %1300 = vperm.xlu0 %1299, %v1222
      %v1301 = vpop.permute.xlu0 %1300
      %v1303 = vrcp.pop %v1226
      %v1304 = vmul.f32 %v1191, %v1303
      %v1305 = vrcp.pop %v1231
      %v1306 = vmul.f32 %v1192, %v1305
      %v1307 = vrcp.pop %v1236
      %v1308 = vmul.f32 %v1193, %v1307
      %v1309 = vrcp.pop %v1241
      %v1310 = vmul.f32 %v1194, %v1309
      %v1311 = vrcp.pop %v1246
      %v1312 = vmul.f32 %v1195, %v1311
      %v1313 = vrcp.pop %v1251
      %v1314 = vmul.f32 %v1196, %v1313
      %v1315 = vrcp.pop %v1256
      %v1316 = vmul.f32 %v1197, %v1315
      %v1317 = vrcp.pop %v1261
      %v1318 = vmul.f32 %v1198, %v1317
      %v1319 = vrcp.pop %v1266
      %v1320 = vmul.f32 %v1199, %v1319
      %v1321 = vrcp.pop %v1271
      %v1322 = vmul.f32 %v1200, %v1321
      %v1323 = vrcp.pop %v1276
      %v1324 = vmul.f32 %v1201, %v1323
      %v1325 = vrcp.pop %v1281
      %v1326 = vmul.f32 %v1202, %v1325
      %v1327 = vrcp.pop %v1286
      %v1328 = vmul.f32 %v1203, %v1327
      %v1329 = vrcp.pop %v1291
      %v1330 = vmul.f32 %v1204, %v1329
      %v1331 = vrcp.pop %v1296
      %v1332 = vmul.f32 %v1205, %v1331
      %v1333 = vrcp.pop %v1301
      %v1334 = vmul.f32 %v1206, %v1333
      %1335 = vst [vmem:[#allocation2] sm:$0xff] %v1304
      %1336 = vst [vmem:[#allocation2 + $0x8] sm:$0xff] %v1306
      %1337 = vst [vmem:[#allocation2 + $0x10] sm:$0xff] %v1308
      %1338 = vst [vmem:[#allocation2 + $0x18] sm:$0xff] %v1310
      %1339 = vst [vmem:[#allocation2 + $0x20] sm:$0xff] %v1312
      %1340 = vst [vmem:[#allocation2 + $0x28] sm:$0xff] %v1314
      %1341 = vst [vmem:[#allocation2 + $0x30] sm:$0xff] %v1316
      %1342 = vst [vmem:[#allocation2 + $0x38] sm:$0xff] %v1318
      %1343 = vst [vmem:[#allocation2 + $0x40] sm:$0xff] %v1320
      %1344 = vst [vmem:[#allocation2 + $0x48] sm:$0xff] %v1322
      %1345 = vst [vmem:[#allocation2 + $0x50] sm:$0xff] %v1324
      %1346 = vst [vmem:[#allocation2 + $0x58] sm:$0xff] %v1326
      %1347 = vst [vmem:[#allocation2 + $0x60] sm:$0xff] %v1328
      %1348 = vst [vmem:[#allocation2 + $0x68] sm:$0xff] %v1330
      %1349 = vst [vmem:[#allocation2 + $0x70] sm:$0xff] %v1332
      %1350 = vst [vmem:[#allocation2 + $0x78] sm:$0xff] %v1334
    $region21: #{tpu_custom_call.1} parent=1 // pred_fallthru
      _
    // Predicated region
    $region22: #{tpu_custom_call.1} parent=1 // pred_check
      _
    $region23: #{tpu_custom_call.1} parent=1 // pred_check_branch
      %1352 = sbr.rel (0) target = $region25
    $region24: #{tpu_custom_call.1} parent=1 // pred_region
      %s1354 = ssub.s32 2048, 2048
      %1355 = vsyncadd [#allocation3], %s1354
      %s1356 = sshll.u32 [#allocation2], 4
      %s1357 = int_to_ptr.vmem [resolvable:$true] %s1356
      %1362 = dma.vmem_to_hbm [thread:$0]  %s1357, 2048, %s3, [#allocation3], 128, 128, 8
    $region25: #{tpu_custom_call.1} parent=1 // pred_fallthru
      _
    // Predicated region
    $region26: #{tpu_custom_call.1} parent=1 // pred_check
      _
    $region27: #{tpu_custom_call.1} parent=1 // pred_check_branch
      %1364 = sbr.rel (0) target = $region29
    $region28: #{tpu_custom_call.1} parent=1 // pred_region
      %1365 = dma.done [#allocation3], 2048
    $region29: #{tpu_custom_call.1} parent=1 // pred_fallthru
      _
    %1366 = vsyncpa [#allocation3], 1

</llo_original>
